<compile_context>
chip_gen: v6e
topology: v6e:2x2x1
jax: 0.10.0
libtpu: 0.0.40
codegen_flags: <defaults>
</compile_context>

<pallas_src>
import functools

import jax
import jax.numpy as jnp
from jax.experimental import pallas as pl
from jax.experimental.pallas import tpu as pltpu

# ---- scaled-down hyper-parameters (structure identical to the PyTorch Net) ----
K1 = 8      # original: 2000
K2 = 8      # original: 1000
W1 = 6      # original: 30
W2 = 4      # original: 10
POOL = 5    # MaxPool2d((1, 5), stride=(1, 1))
L_IN = 48   # original: 450
N_BATCH = 2

L1 = L_IN - W1 + 1                 # after conv1
L1P = L1 - (POOL - 1)              # after pool1
L2 = L1P - W2 + 1                  # after conv2
L3 = L2 - (POOL - 1)               # after pool2
FLAT = K2 * L3                     # flatten size (original: 1000 * 404)

FC1_OUT = 64   # original: 3000
FC2_OUT = 32   # original: 800
FC3_OUT = 16   # original: 100
FC4_OUT = 2    # original: 2

LANE = 128


def _round_up(x, m):
    return ((x + m - 1) // m) * m


K1P = _round_up(K1, LANE)
K2P = _round_up(K2, LANE)
FC1P = _round_up(FC1_OUT, LANE)
FC2P = _round_up(FC2_OUT, LANE)
FC3P = _round_up(FC3_OUT, LANE)
FC4P = _round_up(FC4_OUT, LANE)


def _pad_axis(a, axis, target):
    pad = target - a.shape[axis]
    if pad == 0:
        return a
    widths = [(0, 0)] * a.ndim
    widths[axis] = (0, pad)
    return jnp.pad(a, widths)


# ------------------ gridded matmul (+bias,+ReLU) with K accumulator -------------
def _mm_bias_act_kernel(x_ref, w_ref, b_ref, o_ref, acc_ref, *, relu):
    @pl.when(pl.program_id(2) == 0)
    def _():
        acc_ref[...] = jnp.zeros_like(acc_ref)

    acc_ref[...] += jnp.dot(x_ref[...], w_ref[...],
                            preferred_element_type=jnp.float32)

    @pl.when(pl.program_id(2) == pl.num_programs(2) - 1)
    def _():
        r = acc_ref[...] + b_ref[...]
        if relu:
            r = jnp.maximum(r, 0.0)
        o_ref[...] = r.astype(o_ref.dtype)


def matmul_bias_act(x, w, b, *, relu, out_dtype=jnp.float32,
                    tm=8, tn=128, tk=512):
    """y = relu?(x @ w + b). bf16 MXU inputs, f32 accumulation.

    Returns the (Mp, Np) zero-padded result; the caller slices if needed.
    """
    M, K = x.shape
    _, N = w.shape
    tk = min(tk, _round_up(K, LANE))
    Mp, Kp, Np = _round_up(M, tm), _round_up(K, tk), _round_up(N, tn)
    xp = _pad_axis(_pad_axis(x, 0, Mp), 1, Kp).astype(jnp.bfloat16)
    wp = _pad_axis(_pad_axis(w, 0, Kp), 1, Np).astype(jnp.bfloat16)
    bp = _pad_axis(b.reshape(1, N).astype(jnp.float32), 1, Np)
    grid = (Mp // tm, Np // tn, Kp // tk)
    cost = pl.CostEstimate(
        flops=2 * Mp * Kp * Np,
        transcendentals=0,
        bytes_accessed=(Mp * Kp + Kp * Np) * 2 + Mp * Np * 4 + Np * 4)
    return pl.pallas_call(
        functools.partial(_mm_bias_act_kernel, relu=relu),
        out_shape=jax.ShapeDtypeStruct((Mp, Np), out_dtype),
        grid_spec=pltpu.PrefetchScalarGridSpec(
            num_scalar_prefetch=0,
            grid=grid,
            in_specs=[
                pl.BlockSpec((tm, tk), lambda i, j, k: (i, k)),
                pl.BlockSpec((tk, tn), lambda i, j, k: (k, j)),
                pl.BlockSpec((1, tn), lambda i, j, k: (0, j)),
            ],
            out_specs=pl.BlockSpec((tm, tn), lambda i, j, k: (i, j)),
            scratch_shapes=[pltpu.VMEM((tm, tn), jnp.float32)],
        ),
        compiler_params=pltpu.CompilerParams(
            dimension_semantics=("parallel", "parallel", "arbitrary"),
            vmem_limit_bytes=32 * 1024 * 1024,
        ),
        cost_estimate=cost,
    )(xp, wp, bp)


# -------------------- fused conv1 + bias + ReLU + max-pool ----------------------
def _conv1_relu_pool_kernel(p_ref, w_ref, b_ref, o_ref, *, pool):
    patches = p_ref[0]                                    # (L1, 2*W1) bf16
    h = jnp.dot(patches, w_ref[...], preferred_element_type=jnp.float32)
    h = jnp.maximum(h + b_ref[...], 0.0)                  # (L1, K1P) f32
    lout = o_ref.shape[1]
    m = h[0:lout, :]
    for t in range(1, pool):                              # pool fused in epilogue
        m = jnp.maximum(m, h[t:t + lout, :])
    o_ref[0] = m.astype(o_ref.dtype)


def conv1_relu_pool(patches, w, b):
    n, l1, kin = patches.shape
    kout = w.shape[1]
    lout = l1 - (POOL - 1)
    return pl.pallas_call(
        functools.partial(_conv1_relu_pool_kernel, pool=POOL),
        out_shape=jax.ShapeDtypeStruct((n, lout, kout), jnp.bfloat16),
        grid=(n,),
        in_specs=[
            pl.BlockSpec((1, l1, kin), lambda bi: (bi, 0, 0)),
            pl.BlockSpec((kin, kout), lambda bi: (0, 0)),
            pl.BlockSpec((1, kout), lambda bi: (0, 0)),
        ],
        out_specs=pl.BlockSpec((1, lout, kout), lambda bi: (bi, 0, 0)),
        compiler_params=pltpu.CompilerParams(
            dimension_semantics=("parallel",)),
    )(patches.astype(jnp.bfloat16), w.astype(jnp.bfloat16),
      b.reshape(1, kout).astype(jnp.float32))


# ---------- fused conv2 (tap loop, no im2col) + bias + ReLU + max-pool ----------
def _conv2_relu_pool_kernel(p_ref, w_ref, b_ref, o_ref, *, taps, pool):
    p = p_ref[0].astype(jnp.float32)                      # (L1P, K1P)
    l2 = p.shape[0] - taps + 1
    acc = jnp.zeros((l2, o_ref.shape[2]), jnp.float32)
    for j in range(taps):                                 # conv as tap-wise matmuls
        acc = acc + jnp.dot(p[j:j + l2, :].astype(jnp.bfloat16), w_ref[j],
                            preferred_element_type=jnp.float32)
    h = jnp.maximum(acc + b_ref[...], 0.0)                # (L2, K2P) f32
    lout = o_ref.shape[1]
    m = h[0:lout, :]
    for t in range(1, pool):
        m = jnp.maximum(m, h[t:t + lout, :])
    o_ref[0] = m.astype(o_ref.dtype)


def conv2_relu_pool(p1, w, b):
    n, l1p, kin = p1.shape
    taps, _, kout = w.shape
    l2 = l1p - taps + 1
    lout = l2 - (POOL - 1)
    return pl.pallas_call(
        functools.partial(_conv2_relu_pool_kernel, taps=taps, pool=POOL),
        out_shape=jax.ShapeDtypeStruct((n, lout, kout), jnp.bfloat16),
        grid=(n,),
        in_specs=[
            pl.BlockSpec((1, l1p, kin), lambda bi: (bi, 0, 0)),
            pl.BlockSpec((taps, kin, kout), lambda bi: (0, 0, 0)),
            pl.BlockSpec((1, kout), lambda bi: (0, 0)),
        ],
        out_specs=pl.BlockSpec((1, lout, kout), lambda bi: (bi, 0, 0)),
        compiler_params=pltpu.CompilerParams(
            dimension_semantics=("parallel",)),
    )(p1, w.astype(jnp.bfloat16), b.reshape(1, kout).astype(jnp.float32))


# ------------------------- fused fc2 + fc3 + fc4 tail ---------------------------
def _fc_tail_kernel(h_ref, w2_ref, b2_ref, w3_ref, b3_ref, w4_ref, b4_ref, o_ref):
    a = jnp.dot(h_ref[...], w2_ref[...], preferred_element_type=jnp.float32)
    a = jnp.maximum(a + b2_ref[...], 0.0)
    a = jnp.dot(a.astype(jnp.bfloat16), w3_ref[...],
                preferred_element_type=jnp.float32)
    a = jnp.maximum(a + b3_ref[...], 0.0)
    a = jnp.dot(a.astype(jnp.bfloat16), w4_ref[...],
                preferred_element_type=jnp.float32)
    o_ref[...] = (a + b4_ref[...]).astype(o_ref.dtype)


def fc_tail(h, params):
    mp = h.shape[0]
    w2 = _pad_axis(_pad_axis(params["fc2_w"].T, 0, FC1P), 1, FC2P).astype(jnp.bfloat16)
    b2 = _pad_axis(params["fc2_b"].reshape(1, -1).astype(jnp.float32), 1, FC2P)
    w3 = _pad_axis(_pad_axis(params["fc3_w"].T, 0, FC2P), 1, FC3P).astype(jnp.bfloat16)
    b3 = _pad_axis(params["fc3_b"].reshape(1, -1).astype(jnp.float32), 1, FC3P)
    w4 = _pad_axis(_pad_axis(params["fc4_w"].T, 0, FC3P), 1, FC4P).astype(jnp.bfloat16)
    b4 = _pad_axis(params["fc4_b"].reshape(1, -1).astype(jnp.float32), 1, FC4P)
    return pl.pallas_call(
        _fc_tail_kernel,
        out_shape=jax.ShapeDtypeStruct((mp, FC4P), jnp.float32),
        in_specs=[
            pl.BlockSpec((mp, FC1P), lambda: (0, 0)),
            pl.BlockSpec((FC1P, FC2P), lambda: (0, 0)),
            pl.BlockSpec((1, FC2P), lambda: (0, 0)),
            pl.BlockSpec((FC2P, FC3P), lambda: (0, 0)),
            pl.BlockSpec((1, FC3P), lambda: (0, 0)),
            pl.BlockSpec((FC3P, FC4P), lambda: (0, 0)),
            pl.BlockSpec((1, FC4P), lambda: (0, 0)),
        ],
        out_specs=pl.BlockSpec((mp, FC4P), lambda: (0, 0)),
    )(h, w2, b2, w3, b3, w4, b4)


# ------------------------------ forward pass ------------------------------------
def net_forward(x, params):
    n = x.shape[0]

    # --- pack / pad weights into TPU-friendly (lane-dense) layouts ---
    # TODO(synk): at real scale (K1=2000, FLAT=404000) do this packing once
    # offline instead of per forward call.
    w1 = _pad_axis(params["conv1_w"].reshape(K1, 2 * W1).T, 1, K1P)   # (2*W1,K1P)
    b1 = _pad_axis(params["conv1_b"], 0, K1P)
    w2 = params["conv2_w"][:, :, 0, :].transpose(2, 1, 0)             # (W2,K1,K2)
    w2 = _pad_axis(_pad_axis(w2, 1, K1P), 2, K2P)                     # (W2,K1P,K2P)
    b2 = _pad_axis(params["conv2_b"], 0, K2P)
    # fold PyTorch channel-major flatten + channel padding into fc1's weight so
    # the (N, L3, K2P) conv output feeds fc1 with no activation transpose.
    wf1 = params["fc1_w"].reshape(FC1_OUT, K2, L3).transpose(2, 1, 0)  # (L3,K2,O)
    wf1 = _pad_axis(wf1, 1, K2P).reshape(L3 * K2P, FC1_OUT)

    # --- conv1: Conv2d(1, K1, (2, W1), stride=(2, 1)) -> one output row ---
    # (conv1's im2col is tiny: C_in=1, 2*W1 features; built in the wrapper)
    xs = x[:, 0]                                                      # (N, 2, L)
    idx1 = jnp.arange(L1)[:, None] + jnp.arange(W1)[None, :]          # (L1, W1)
    patches1 = xs[:, :, idx1].transpose(0, 2, 1, 3).reshape(n, L1, 2 * W1)

    p1 = conv1_relu_pool(patches1, w1, b1)        # (N, L1P, K1P) bf16, pooled
    p2 = conv2_relu_pool(p1, w2, b2)              # (N, L3,  K2P) bf16, pooled

    flat = p2.reshape(n, L3 * K2P)                # no transpose (folded into wf1)
    h = matmul_bias_act(flat, wf1, params["fc1_b"], relu=True,
                        out_dtype=jnp.bfloat16)   # (Mp, FC1P) bf16
    out = fc_tail(h, params)                      # (Mp, FC4P) f32
    return out[:n, :FC4_OUT]


# ------------------- pure-JAX reference (mirrors bf16 MXU math) ------------------
def _bdot(a, b):
    return jnp.dot(a.astype(jnp.bfloat16), b.astype(jnp.bfloat16),
                   preferred_element_type=jnp.float32)


def net_forward_ref(x, params):
    n = x.shape[0]
    xs = x[:, 0]
    idx1 = jnp.arange(L1)[:, None] + jnp.arange(W1)[None, :]
    patches1 = xs[:, :, idx1].transpose(0, 2, 1, 3).reshape(n * L1, 2 * W1)
    w1 = params["conv1_w"].reshape(K1, 2 * W1).T
    h1 = jnp.maximum(_bdot(patches1, w1).reshape(n, L1, K1)
                     + params["conv1_b"], 0.0)
    p1 = jnp.max(jnp.stack([h1[:, j:j + L1P] for j in range(POOL)]),
                 axis=0).astype(jnp.bfloat16)

    w2t = params["conv2_w"][:, :, 0, :].transpose(2, 1, 0)   # (W2, K1, K2)
    acc = jnp.zeros((n, L2, K2), jnp.float32)
    for j in range(W2):
        acc = acc + _bdot(p1[:, j:j + L2].reshape(n * L2, K1),
                          w2t[j]).reshape(n, L2, K2)
    h2 = jnp.maximum(acc + params["conv2_b"], 0.0)
    p2 = jnp.max(jnp.stack([h2[:, j:j + L3] for j in range(POOL)]),
                 axis=0).astype(jnp.bfloat16)

    flat = p2.transpose(0, 2, 1).reshape(n, FLAT)            # PyTorch NCHW flatten
    h = jnp.maximum(_bdot(flat, params["fc1_w"].T) + params["fc1_b"], 0.0)
    h = jnp.maximum(_bdot(h.astype(jnp.bfloat16), params["fc2_w"].T)
                    + params["fc2_b"], 0.0)
    h = jnp.maximum(_bdot(h.astype(jnp.bfloat16), params["fc3_w"].T)
                    + params["fc3_b"], 0.0)
    return _bdot(h.astype(jnp.bfloat16), params["fc4_w"].T) + params["fc4_b"]


# ------------------------------ param init --------------------------------------
def init_params(key):
    ks = jax.random.split(key, 12)
    s = 0.2
    return {
        "conv1_w": s * jax.random.normal(ks[0], (K1, 1, 2, W1), jnp.float32),
        "conv1_b": s * jax.random.normal(ks[1], (K1,), jnp.float32),
        "conv2_w": s * jax.random.normal(ks[2], (K2, K1, 1, W2), jnp.float32),
        "conv2_b": s * jax.random.normal(ks[3], (K2,), jnp.float32),
        "fc1_w": s * jax.random.normal(ks[4], (FC1_OUT, FLAT), jnp.float32),
        "fc1_b": s * jax.random.normal(ks[5], (FC1_OUT,), jnp.float32),
        "fc2_w": s * jax.random.normal(ks[6], (FC2_OUT, FC1_OUT), jnp.float32),
        "fc2_b": s * jax.random.normal(ks[7], (FC2_OUT,), jnp.float32),
        "fc3_w": s * jax.random.normal(ks[8], (FC3_OUT, FC2_OUT), jnp.float32),
        "fc3_b": s * jax.random.normal(ks[9], (FC3_OUT,), jnp.float32),
        "fc4_w": s * jax.random.normal(ks[10], (FC4_OUT, FC3_OUT), jnp.float32),
        "fc4_b": s * jax.random.normal(ks[11], (FC4_OUT,), jnp.float32),
    }


if __name__ == "__main__":
    key = jax.random.PRNGKey(0)
    k_x, k_p = jax.random.split(key)
    x = jax.random.normal(k_x, (N_BATCH, 1, 2, L_IN), jnp.float32)
    params = init_params(k_p)

    out = jax.block_until_ready(jax.jit(net_forward)(x, params))
    ref = jax.block_until_ready(jax.jit(net_forward_ref)(x, params))

    assert out.shape == (N_BATCH, FC4_OUT), out.shape
    max_err = float(jnp.max(jnp.abs(out - ref)))
    assert bool(jnp.allclose(out, ref, atol=1e-2, rtol=2e-2)), max_err
    print("KERNEL_OK")
</pallas_src>

<mosaic_0001>
module attributes {stable_mosaic.version = 11 : i64} {
  func.func @_conv1_relu_pool_kernel(%arg0: i32, %arg1: memref<1x43x12xbf16, #tpu.memory_space<vmem>>, %arg2: memref<12x128xbf16, #tpu.memory_space<vmem>>, %arg3: memref<1x128xf32, #tpu.memory_space<vmem>>, %arg4: memref<1x39x128xbf16, #tpu.memory_space<vmem>>) attributes {dimension_semantics = [#tpu.dimension_semantics<parallel>], iteration_bounds = array<i64: 2>, scalar_prefetch = 0 : i64, scratch_operands = 0 : i64, tpu.core_type = #tpu.core_type<tc>, window_params = [{transform_indices = @transform_0, window_bounds = array<i64: 1, 43, 12>}, {pipeline_mode = #tpu.pipeline_mode<synchronous>, transform_indices = @transform_1, window_bounds = array<i64: 12, 128>}, {pipeline_mode = #tpu.pipeline_mode<synchronous>, transform_indices = @transform_2, window_bounds = array<i64: 1, 128>}, {transform_indices = @transform_3, window_bounds = array<i64: 1, 39, 128>}]} {
    %c0 = arith.constant 0 : index
    %c0_0 = arith.constant 0 : index
    %c0_1 = arith.constant 0 : index
    %0 = vector.load %arg1[%c0, %c0_0, %c0_1] : memref<1x43x12xbf16, #tpu.memory_space<vmem>>, vector<1x43x12xbf16>
    %1 = vector.shape_cast %0 : vector<1x43x12xbf16> to vector<43x12xbf16>
    %c0_2 = arith.constant 0 : index
    %c0_3 = arith.constant 0 : index
    %2 = vector.load %arg2[%c0_2, %c0_3] : memref<12x128xbf16, #tpu.memory_space<vmem>>, vector<12x128xbf16>
    %cst = arith.constant dense<0.000000e+00> : vector<43x128xf32>
    %3 = tpu.matmul %1, %2, %cst {dimension_numbers = #tpu.dot_dimension_numbers<[1], [0], [0], [1], [0, 0, 1, 1], [], []>} : vector<43x12xbf16>, vector<12x128xbf16>, vector<43x128xf32> -> vector<43x128xf32>
    %c0_4 = arith.constant 0 : index
    %c0_5 = arith.constant 0 : index
    %4 = vector.load %arg3[%c0_4, %c0_5] : memref<1x128xf32, #tpu.memory_space<vmem>>, vector<1x128xf32>
    %5 = vector.broadcast %4 : vector<1x128xf32> to vector<43x128xf32>
    %6 = arith.addf %3, %5 : vector<43x128xf32>
    %cst_6 = arith.constant 0.000000e+00 : f32
    %7 = vector.broadcast %cst_6 : f32 to vector<43x128xf32>
    %8 = arith.maximumf %6, %7 : vector<43x128xf32>
    %9 = vector.extract_strided_slice %8 {offsets = [0, 0], sizes = [39, 128], strides = [1, 1]} : vector<43x128xf32> to vector<39x128xf32>
    %10 = vector.extract_strided_slice %8 {offsets = [1, 0], sizes = [39, 128], strides = [1, 1]} : vector<43x128xf32> to vector<39x128xf32>
    %11 = arith.maximumf %9, %10 : vector<39x128xf32>
    %12 = vector.extract_strided_slice %8 {offsets = [2, 0], sizes = [39, 128], strides = [1, 1]} : vector<43x128xf32> to vector<39x128xf32>
    %13 = arith.maximumf %11, %12 : vector<39x128xf32>
    %14 = vector.extract_strided_slice %8 {offsets = [3, 0], sizes = [39, 128], strides = [1, 1]} : vector<43x128xf32> to vector<39x128xf32>
    %15 = arith.maximumf %13, %14 : vector<39x128xf32>
    %16 = vector.extract_strided_slice %8 {offsets = [4, 0], sizes = [39, 128], strides = [1, 1]} : vector<43x128xf32> to vector<39x128xf32>
    %17 = arith.maximumf %15, %16 : vector<39x128xf32>
    %18 = arith.truncf %17 : vector<39x128xf32> to vector<39x128xbf16>
    %c0_7 = arith.constant 0 : index
    %c0_8 = arith.constant 0 : index
    %c0_9 = arith.constant 0 : index
    %19 = vector.load %arg4[%c0_7, %c0_8, %c0_9] : memref<1x39x128xbf16, #tpu.memory_space<vmem>>, vector<1x39x128xbf16>
    %20 = vector.shape_cast %19 : vector<1x39x128xbf16> to vector<39x128xbf16>
    %21 = vector.shape_cast %18 : vector<39x128xbf16> to vector<1x39x128xbf16>
    tpu.vector_store %arg4[%c0_7, %c0_8, %c0_9], %21 {strides = array<i32>} : memref<1x39x128xbf16, #tpu.memory_space<vmem>>, vector<1x39x128xbf16>,
    return
  }
  func.func @transform_0(%arg0: i32) -> (i32, i32, i32) {
    %c0_i32 = arith.constant 0 : i32
    %c0_i32_0 = arith.constant 0 : i32
    %c0_i32_1 = arith.constant 0 : i32
    return %arg0, %c0_i32, %c0_i32_0 : i32, i32, i32
  }
  func.func @transform_1(%arg0: i32) -> (i32, i32) {
    %c0_i32 = arith.constant 0 : i32
    %c0_i32_0 = arith.constant 0 : i32
    %c0_i32_1 = arith.constant 0 : i32
    return %c0_i32, %c0_i32_0 : i32, i32
  }
  func.func @transform_2(%arg0: i32) -> (i32, i32) {
    %c0_i32 = arith.constant 0 : i32
    %c0_i32_0 = arith.constant 0 : i32
    %c0_i32_1 = arith.constant 0 : i32
    return %c0_i32, %c0_i32_0 : i32, i32
  }
  func.func @transform_3(%arg0: i32) -> (i32, i32, i32) {
    %c0_i32 = arith.constant 0 : i32
    %c0_i32_0 = arith.constant 0 : i32
    %c0_i32_1 = arith.constant 0 : i32
    return %arg0, %c0_i32, %c0_i32_0 : i32, i32, i32
  }
}

module attributes {stable_mosaic.version = 11 : i64} {
  func.func @_conv2_relu_pool_kernel(%arg0: i32, %arg1: memref<1x39x128xbf16, #tpu.memory_space<vmem>>, %arg2: memref<4x128x128xbf16, #tpu.memory_space<vmem>>, %arg3: memref<1x128xf32, #tpu.memory_space<vmem>>, %arg4: memref<1x32x128xbf16, #tpu.memory_space<vmem>>) attributes {dimension_semantics = [#tpu.dimension_semantics<parallel>], iteration_bounds = array<i64: 2>, scalar_prefetch = 0 : i64, scratch_operands = 0 : i64, tpu.core_type = #tpu.core_type<tc>, window_params = [{transform_indices = @transform_0, window_bounds = array<i64: 1, 39, 128>}, {pipeline_mode = #tpu.pipeline_mode<synchronous>, transform_indices = @transform_1, window_bounds = array<i64: 4, 128, 128>}, {pipeline_mode = #tpu.pipeline_mode<synchronous>, transform_indices = @transform_2, window_bounds = array<i64: 1, 128>}, {transform_indices = @transform_3, window_bounds = array<i64: 1, 32, 128>}]} {
    %c0 = arith.constant 0 : index
    %c0_0 = arith.constant 0 : index
    %c0_1 = arith.constant 0 : index
    %0 = vector.load %arg1[%c0, %c0_0, %c0_1] : memref<1x39x128xbf16, #tpu.memory_space<vmem>>, vector<1x39x128xbf16>
    %1 = vector.shape_cast %0 : vector<1x39x128xbf16> to vector<39x128xbf16>
    %2 = arith.extf %1 : vector<39x128xbf16> to vector<39x128xf32>
    %cst = arith.constant 0.000000e+00 : f32
    %3 = vector.broadcast %cst : f32 to vector<36x128xf32>
    %4 = vector.extract_strided_slice %2 {offsets = [0, 0], sizes = [36, 128], strides = [1, 1]} : vector<39x128xf32> to vector<36x128xf32>
    %5 = arith.truncf %4 : vector<36x128xf32> to vector<36x128xbf16>
    %c0_2 = arith.constant 0 : index
    %c0_3 = arith.constant 0 : index
    %c0_4 = arith.constant 0 : index
    %6 = vector.load %arg2[%c0_2, %c0_3, %c0_4] : memref<4x128x128xbf16, #tpu.memory_space<vmem>>, vector<1x128x128xbf16>
    %7 = vector.shape_cast %6 : vector<1x128x128xbf16> to vector<128x128xbf16>
    %cst_5 = arith.constant dense<0.000000e+00> : vector<36x128xf32>
    %8 = tpu.matmul %5, %7, %cst_5 {dimension_numbers = #tpu.dot_dimension_numbers<[1], [0], [0], [1], [0, 0, 1, 1], [], []>} : vector<36x128xbf16>, vector<128x128xbf16>, vector<36x128xf32> -> vector<36x128xf32>
    %9 = arith.addf %3, %8 : vector<36x128xf32>
    %10 = vector.extract_strided_slice %2 {offsets = [1, 0], sizes = [36, 128], strides = [1, 1]} : vector<39x128xf32> to vector<36x128xf32>
    %11 = arith.truncf %10 : vector<36x128xf32> to vector<36x128xbf16>
    %c1 = arith.constant 1 : index
    %c0_6 = arith.constant 0 : index
    %c0_7 = arith.constant 0 : index
    %12 = vector.load %arg2[%c1, %c0_6, %c0_7] : memref<4x128x128xbf16, #tpu.memory_space<vmem>>, vector<1x128x128xbf16>
    %13 = vector.shape_cast %12 : vector<1x128x128xbf16> to vector<128x128xbf16>
    %cst_8 = arith.constant dense<0.000000e+00> : vector<36x128xf32>
    %14 = tpu.matmul %11, %13, %cst_8 {dimension_numbers = #tpu.dot_dimension_numbers<[1], [0], [0], [1], [0, 0, 1, 1], [], []>} : vector<36x128xbf16>, vector<128x128xbf16>, vector<36x128xf32> -> vector<36x128xf32>
    %15 = arith.addf %9, %14 : vector<36x128xf32>
    %16 = vector.extract_strided_slice %2 {offsets = [2, 0], sizes = [36, 128], strides = [1, 1]} : vector<39x128xf32> to vector<36x128xf32>
    %17 = arith.truncf %16 : vector<36x128xf32> to vector<36x128xbf16>
    %c2 = arith.constant 2 : index
    %c0_9 = arith.constant 0 : index
    %c0_10 = arith.constant 0 : index
    %18 = vector.load %arg2[%c2, %c0_9, %c0_10] : memref<4x128x128xbf16, #tpu.memory_space<vmem>>, vector<1x128x128xbf16>
    %19 = vector.shape_cast %18 : vector<1x128x128xbf16> to vector<128x128xbf16>
    %cst_11 = arith.constant dense<0.000000e+00> : vector<36x128xf32>
    %20 = tpu.matmul %17, %19, %cst_11 {dimension_numbers = #tpu.dot_dimension_numbers<[1], [0], [0], [1], [0, 0, 1, 1], [], []>} : vector<36x128xbf16>, vector<128x128xbf16>, vector<36x128xf32> -> vector<36x128xf32>
    %21 = arith.addf %15, %20 : vector<36x128xf32>
    %22 = vector.extract_strided_slice %2 {offsets = [3, 0], sizes = [36, 128], strides = [1, 1]} : vector<39x128xf32> to vector<36x128xf32>
    %23 = arith.truncf %22 : vector<36x128xf32> to vector<36x128xbf16>
    %c3 = arith.constant 3 : index
    %c0_12 = arith.constant 0 : index
    %c0_13 = arith.constant 0 : index
    %24 = vector.load %arg2[%c3, %c0_12, %c0_13] : memref<4x128x128xbf16, #tpu.memory_space<vmem>>, vector<1x128x128xbf16>
    %25 = vector.shape_cast %24 : vector<1x128x128xbf16> to vector<128x128xbf16>
    %cst_14 = arith.constant dense<0.000000e+00> : vector<36x128xf32>
    %26 = tpu.matmul %23, %25, %cst_14 {dimension_numbers = #tpu.dot_dimension_numbers<[1], [0], [0], [1], [0, 0, 1, 1], [], []>} : vector<36x128xbf16>, vector<128x128xbf16>, vector<36x128xf32> -> vector<36x128xf32>
    %27 = arith.addf %21, %26 : vector<36x128xf32>
    %c0_15 = arith.constant 0 : index
    %c0_16 = arith.constant 0 : index
    %28 = vector.load %arg3[%c0_15, %c0_16] : memref<1x128xf32, #tpu.memory_space<vmem>>, vector<1x128xf32>
    %29 = vector.broadcast %28 : vector<1x128xf32> to vector<36x128xf32>
    %30 = arith.addf %27, %29 : vector<36x128xf32>
    %cst_17 = arith.constant 0.000000e+00 : f32
    %31 = vector.broadcast %cst_17 : f32 to vector<36x128xf32>
    %32 = arith.maximumf %30, %31 : vector<36x128xf32>
    %33 = vector.extract_strided_slice %32 {offsets = [0, 0], sizes = [32, 128], strides = [1, 1]} : vector<36x128xf32> to vector<32x128xf32>
    %34 = vector.extract_strided_slice %32 {offsets = [1, 0], sizes = [32, 128], strides = [1, 1]} : vector<36x128xf32> to vector<32x128xf32>
    %35 = arith.maximumf %33, %34 : vector<32x128xf32>
    %36 = vector.extract_strided_slice %32 {offsets = [2, 0], sizes = [32, 128], strides = [1, 1]} : vector<36x128xf32> to vector<32x128xf32>
    %37 = arith.maximumf %35, %36 : vector<32x128xf32>
    %38 = vector.extract_strided_slice %32 {offsets = [3, 0], sizes = [32, 128], strides = [1, 1]} : vector<36x128xf32> to vector<32x128xf32>
    %39 = arith.maximumf %37, %38 : vector<32x128xf32>
    %40 = vector.extract_strided_slice %32 {offsets = [4, 0], sizes = [32, 128], strides = [1, 1]} : vector<36x128xf32> to vector<32x128xf32>
    %41 = arith.maximumf %39, %40 : vector<32x128xf32>
    %42 = arith.truncf %41 : vector<32x128xf32> to vector<32x128xbf16>
    %c0_18 = arith.constant 0 : index
    %c0_19 = arith.constant 0 : index
    %c0_20 = arith.constant 0 : index
    %43 = vector.load %arg4[%c0_18, %c0_19, %c0_20] : memref<1x32x128xbf16, #tpu.memory_space<vmem>>, vector<1x32x128xbf16>
    %44 = vector.shape_cast %43 : vector<1x32x128xbf16> to vector<32x128xbf16>
    %45 = vector.shape_cast %42 : vector<32x128xbf16> to vector<1x32x128xbf16>
    tpu.vector_store %arg4[%c0_18, %c0_19, %c0_20], %45 {strides = array<i32>} : memref<1x32x128xbf16, #tpu.memory_space<vmem>>, vector<1x32x128xbf16>,
    return
  }
  func.func @transform_0(%arg0: i32) -> (i32, i32, i32) {
    %c0_i32 = arith.constant 0 : i32
    %c0_i32_0 = arith.constant 0 : i32
    %c0_i32_1 = arith.constant 0 : i32
    return %arg0, %c0_i32, %c0_i32_0 : i32, i32, i32
  }
  func.func @transform_1(%arg0: i32) -> (i32, i32, i32) {
    %c0_i32 = arith.constant 0 : i32
    %c0_i32_0 = arith.constant 0 : i32
    %c0_i32_1 = arith.constant 0 : i32
    %c0_i32_2 = arith.constant 0 : i32
    return %c0_i32, %c0_i32_0, %c0_i32_1 : i32, i32, i32
  }
  func.func @transform_2(%arg0: i32) -> (i32, i32) {
    %c0_i32 = arith.constant 0 : i32
    %c0_i32_0 = arith.constant 0 : i32
    %c0_i32_1 = arith.constant 0 : i32
    return %c0_i32, %c0_i32_0 : i32, i32
  }
  func.func @transform_3(%arg0: i32) -> (i32, i32, i32) {
    %c0_i32 = arith.constant 0 : i32
    %c0_i32_0 = arith.constant 0 : i32
    %c0_i32_1 = arith.constant 0 : i32
    return %arg0, %c0_i32, %c0_i32_0 : i32, i32, i32
  }
}

module attributes {stable_mosaic.version = 11 : i64} {
  func.func @_mm_bias_act_kernel(%arg0: i32, %arg1: i32, %arg2: i32, %arg3: memref<8x512xbf16, #tpu.memory_space<vmem>>, %arg4: memref<512x128xbf16, #tpu.memory_space<vmem>>, %arg5: memref<1x128xf32, #tpu.memory_space<vmem>>, %arg6: memref<8x128xbf16, #tpu.memory_space<vmem>>, %arg7: memref<8x128xf32, #tpu.memory_space<vmem>>) attributes {dimension_semantics = [#tpu.dimension_semantics<parallel>, #tpu.dimension_semantics<parallel>, #tpu.dimension_semantics<arbitrary>], iteration_bounds = array<i64: 1, 1, 8>, scalar_prefetch = 0 : i64, scratch_operands = 1 : i64, tpu.core_type = #tpu.core_type<tc>, window_params = [{transform_indices = @transform_0, window_bounds = array<i64: 8, 512>}, {transform_indices = @transform_1, window_bounds = array<i64: 512, 128>}, {transform_indices = @transform_2, window_bounds = array<i64: 1, 128>}, {transform_indices = @transform_3, window_bounds = array<i64: 8, 128>}]} {
    %c0_i32 = arith.constant 0 : i32
    %0 = arith.cmpi eq, %arg2, %c0_i32 : i32
    %1 = arith.extui %0 : i1 to i32
    %c0_i32_0 = arith.constant 0 : i32
    %2 = arith.cmpi ne, %1, %c0_i32_0 : i32
    scf.if %2 {
      %cst_9 = arith.constant 0.000000e+00 : f32
      %12 = vector.broadcast %cst_9 : f32 to vector<8x128xf32>
      %c0_10 = arith.constant 0 : index
      %c0_11 = arith.constant 0 : index
      %13 = vector.load %arg7[%c0_10, %c0_11] : memref<8x128xf32, #tpu.memory_space<vmem>>, vector<8x128xf32>
      tpu.vector_store %arg7[%c0_10, %c0_11], %12 {strides = array<i32>} : memref<8x128xf32, #tpu.memory_space<vmem>>, vector<8x128xf32>,
    } else {
    }
    %c0 = arith.constant 0 : index
    %c0_1 = arith.constant 0 : index
    %3 = vector.load %arg7[%c0, %c0_1] : memref<8x128xf32, #tpu.memory_space<vmem>>, vector<8x128xf32>
    %c0_2 = arith.constant 0 : index
    %c0_3 = arith.constant 0 : index
    %4 = vector.load %arg3[%c0_2, %c0_3] : memref<8x512xbf16, #tpu.memory_space<vmem>>, vector<8x512xbf16>
    %c0_4 = arith.constant 0 : index
    %c0_5 = arith.constant 0 : index
    %5 = vector.load %arg4[%c0_4, %c0_5] : memref<512x128xbf16, #tpu.memory_space<vmem>>, vector<512x128xbf16>
    %cst = arith.constant dense<0.000000e+00> : vector<8x128xf32>
    %6 = tpu.matmul %4, %5, %cst {dimension_numbers = #tpu.dot_dimension_numbers<[1], [0], [0], [1], [0, 0, 1, 1], [], []>} : vector<8x512xbf16>, vector<512x128xbf16>, vector<8x128xf32> -> vector<8x128xf32>
    %7 = arith.addf %3, %6 : vector<8x128xf32>
    %c0_6 = arith.constant 0 : index
    %c0_7 = arith.constant 0 : index
    %8 = vector.load %arg7[%c0_6, %c0_7] : memref<8x128xf32, #tpu.memory_space<vmem>>, vector<8x128xf32>
    tpu.vector_store %arg7[%c0_6, %c0_7], %7 {strides = array<i32>} : memref<8x128xf32, #tpu.memory_space<vmem>>, vector<8x128xf32>,
    %c7_i32 = arith.constant 7 : i32
    %9 = arith.cmpi eq, %arg2, %c7_i32 : i32
    %10 = arith.extui %9 : i1 to i32
    %c0_i32_8 = arith.constant 0 : i32
    %11 = arith.cmpi ne, %10, %c0_i32_8 : i32
    scf.if %11 {
      %c0_9 = arith.constant 0 : index
      %c0_10 = arith.constant 0 : index
      %12 = vector.load %arg7[%c0_9, %c0_10] : memref<8x128xf32, #tpu.memory_space<vmem>>, vector<8x128xf32>
      %c0_11 = arith.constant 0 : index
      %c0_12 = arith.constant 0 : index
      %13 = vector.load %arg5[%c0_11, %c0_12] : memref<1x128xf32, #tpu.memory_space<vmem>>, vector<1x128xf32>
      %14 = vector.broadcast %13 : vector<1x128xf32> to vector<8x128xf32>
      %15 = arith.addf %12, %14 : vector<8x128xf32>
      %cst_13 = arith.constant 0.000000e+00 : f32
      %16 = vector.broadcast %cst_13 : f32 to vector<8x128xf32>
      %17 = arith.maximumf %15, %16 : vector<8x128xf32>
      %18 = arith.truncf %17 : vector<8x128xf32> to vector<8x128xbf16>
      %c0_14 = arith.constant 0 : index
      %c0_15 = arith.constant 0 : index
      %19 = vector.load %arg6[%c0_14, %c0_15] : memref<8x128xbf16, #tpu.memory_space<vmem>>, vector<8x128xbf16>
      tpu.vector_store %arg6[%c0_14, %c0_15], %18 {strides = array<i32>} : memref<8x128xbf16, #tpu.memory_space<vmem>>, vector<8x128xbf16>,
    } else {
    }
    return
  }
  func.func @transform_0(%arg0: i32, %arg1: i32, %arg2: i32) -> (i32, i32) {
    %c0_i32 = arith.constant 0 : i32
    return %arg0, %arg2 : i32, i32
  }
  func.func @transform_1(%arg0: i32, %arg1: i32, %arg2: i32) -> (i32, i32) {
    %c0_i32 = arith.constant 0 : i32
    return %arg2, %arg1 : i32, i32
  }
  func.func @transform_2(%arg0: i32, %arg1: i32, %arg2: i32) -> (i32, i32) {
    %c0_i32 = arith.constant 0 : i32
    %c0_i32_0 = arith.constant 0 : i32
    return %c0_i32, %arg1 : i32, i32
  }
  func.func @transform_3(%arg0: i32, %arg1: i32, %arg2: i32) -> (i32, i32) {
    %c0_i32 = arith.constant 0 : i32
    return %arg0, %arg1 : i32, i32
  }
}

module attributes {stable_mosaic.version = 11 : i64} {
  func.func @_fc_tail_kernel(%arg0: memref<8x128xbf16, #tpu.memory_space<vmem>>, %arg1: memref<128x128xbf16, #tpu.memory_space<vmem>>, %arg2: memref<1x128xf32, #tpu.memory_space<vmem>>, %arg3: memref<128x128xbf16, #tpu.memory_space<vmem>>, %arg4: memref<1x128xf32, #tpu.memory_space<vmem>>, %arg5: memref<128x128xbf16, #tpu.memory_space<vmem>>, %arg6: memref<1x128xf32, #tpu.memory_space<vmem>>, %arg7: memref<8x128xf32, #tpu.memory_space<vmem>>) attributes {dimension_semantics = [], scalar_prefetch = 0 : i64, scratch_operands = 0 : i64, tpu.core_type = #tpu.core_type<tc>} {
    %c0 = arith.constant 0 : index
    %c0_0 = arith.constant 0 : index
    %0 = vector.load %arg0[%c0, %c0_0] : memref<8x128xbf16, #tpu.memory_space<vmem>>, vector<8x128xbf16>
    %c0_1 = arith.constant 0 : index
    %c0_2 = arith.constant 0 : index
    %1 = vector.load %arg1[%c0_1, %c0_2] : memref<128x128xbf16, #tpu.memory_space<vmem>>, vector<128x128xbf16>
    %cst = arith.constant dense<0.000000e+00> : vector<8x128xf32>
    %2 = tpu.matmul %0, %1, %cst {dimension_numbers = #tpu.dot_dimension_numbers<[1], [0], [0], [1], [0, 0, 1, 1], [], []>} : vector<8x128xbf16>, vector<128x128xbf16>, vector<8x128xf32> -> vector<8x128xf32>
    %c0_3 = arith.constant 0 : index
    %c0_4 = arith.constant 0 : index
    %3 = vector.load %arg2[%c0_3, %c0_4] : memref<1x128xf32, #tpu.memory_space<vmem>>, vector<1x128xf32>
    %4 = vector.broadcast %3 : vector<1x128xf32> to vector<8x128xf32>
    %5 = arith.addf %2, %4 : vector<8x128xf32>
    %cst_5 = arith.constant 0.000000e+00 : f32
    %6 = vector.broadcast %cst_5 : f32 to vector<8x128xf32>
    %7 = arith.maximumf %5, %6 : vector<8x128xf32>
    %8 = arith.truncf %7 : vector<8x128xf32> to vector<8x128xbf16>
    %c0_6 = arith.constant 0 : index
    %c0_7 = arith.constant 0 : index
    %9 = vector.load %arg3[%c0_6, %c0_7] : memref<128x128xbf16, #tpu.memory_space<vmem>>, vector<128x128xbf16>
    %cst_8 = arith.constant dense<0.000000e+00> : vector<8x128xf32>
    %10 = tpu.matmul %8, %9, %cst_8 {dimension_numbers = #tpu.dot_dimension_numbers<[1], [0], [0], [1], [0, 0, 1, 1], [], []>} : vector<8x128xbf16>, vector<128x128xbf16>, vector<8x128xf32> -> vector<8x128xf32>
    %c0_9 = arith.constant 0 : index
    %c0_10 = arith.constant 0 : index
    %11 = vector.load %arg4[%c0_9, %c0_10] : memref<1x128xf32, #tpu.memory_space<vmem>>, vector<1x128xf32>
    %12 = vector.broadcast %11 : vector<1x128xf32> to vector<8x128xf32>
    %13 = arith.addf %10, %12 : vector<8x128xf32>
    %cst_11 = arith.constant 0.000000e+00 : f32
    %14 = vector.broadcast %cst_11 : f32 to vector<8x128xf32>
    %15 = arith.maximumf %13, %14 : vector<8x128xf32>
    %16 = arith.truncf %15 : vector<8x128xf32> to vector<8x128xbf16>
    %c0_12 = arith.constant 0 : index
    %c0_13 = arith.constant 0 : index
    %17 = vector.load %arg5[%c0_12, %c0_13] : memref<128x128xbf16, #tpu.memory_space<vmem>>, vector<128x128xbf16>
    %cst_14 = arith.constant dense<0.000000e+00> : vector<8x128xf32>
    %18 = tpu.matmul %16, %17, %cst_14 {dimension_numbers = #tpu.dot_dimension_numbers<[1], [0], [0], [1], [0, 0, 1, 1], [], []>} : vector<8x128xbf16>, vector<128x128xbf16>, vector<8x128xf32> -> vector<8x128xf32>
    %c0_15 = arith.constant 0 : index
    %c0_16 = arith.constant 0 : index
    %19 = vector.load %arg6[%c0_15, %c0_16] : memref<1x128xf32, #tpu.memory_space<vmem>>, vector<1x128xf32>
    %20 = vector.broadcast %19 : vector<1x128xf32> to vector<8x128xf32>
    %21 = arith.addf %18, %20 : vector<8x128xf32>
    %c0_17 = arith.constant 0 : index
    %c0_18 = arith.constant 0 : index
    %22 = vector.load %arg7[%c0_17, %c0_18] : memref<8x128xf32, #tpu.memory_space<vmem>>, vector<8x128xf32>
    tpu.vector_store %arg7[%c0_17, %c0_18], %21 {strides = array<i32>} : memref<8x128xf32, #tpu.memory_space<vmem>>, vector<8x128xf32>,
    return
  }
}

</mosaic_0001>

<llo_original>
// kernel: net_forward.4
$region0: #{net_forward.4}
  #allocation0 [shape = 'u32[]', space=smem, size = 0x4, offset = 0x4, fixed_abs, tag = 'smem constant byte address 0x4 - core index']
  #allocation1 [shape = 'u32[144,128]{1,0:T(1,128)}', space=vmem, size = 0x12000, scoped, tag = 'internal scratch']
  %s0 = inlined_call_operand.vmem [shape: bf16[2,43,12], index: 0, kind: input, shape index: {}]
  %s1 = inlined_call_operand.vmem [shape: bf16[12,128], index: 1, kind: input, shape index: {}]
  %s2 = inlined_call_operand.vmem [shape: f32[1,128], index: 2, kind: input, shape index: {}]
  %s3 = inlined_call_operand.vmem [shape: bf16[2,39,128], index: 3, kind: output, shape index: {}]
  %s4 = sld [smem:[#allocation0]]
  $region45: #{net_forward.4} parent=0
    _
  %s6 = ssub.s32 1, %s4
  %s7 = scalar_select 0, %s6, %s4
  loop: start=0, step=1, limit=4
  $region2: #{net_forward.4} parent=0 // loop_pre_header
    _
  $region3: #{net_forward.4} parent=0 // loop_header
    %s9 = sphi 0, %s13
    %p10 = scmp.ge.s32.totalorder %s9, 4
    %s19 = sphi 0, %s21
    %s22 = sphi 0, %s19
    %s23 = sphi 0, %s22
    %s39 = sphi 0, %s23
    %s43 = sphi 0, %s43
    %s45 = sphi 0, %s43
    %s46 = sphi 0, %s45
    %s60 = sphi 0, %s46
    %s64 = sphi 0, %s64
    %s66 = sphi 0, %s64
    %s67 = sphi 0, %s66
    %s81 = sphi 0, %s67
    %s87 = sphi 0, %s89
    %s90 = sphi 0, %s87
    %s91 = sphi 0, %s90
    %s107 = sphi 0, %s91
  $region4: #{net_forward.4} parent=0 // loop_header_branch
    %12 = sbr.rel (%p10) target = $region8
  $region5: #{net_forward.4} parent=0 // loop_body
    %s14 = ssub.s32 %s9, 1
    %s15 = ssub.s32 %s9, 2
    %s16 = sadd.s32 %s9, 1
    %s17 = ssub.s32 %s9, %s16
    %p18 = scmp.eq.s32.totalorder %s17, 0
    %s20 = sadd.s32 %s19, 1
    %s21 = scalar_select %p18, %s19, %s20
    %p24 = pneg %p18
    %p25 = scmp.eq.s32.totalorder %s9, 1
    %p26 = por %p24, %p25
    %p27 = scmp.ne.s32.totalorder %s19, %s22
    %p28 = scmp.eq.s32.totalorder %s9, 0
    %p29 = por %p27, %p28
    %p30 = scmp.ne.s32.totalorder %s19, %s22
    %p31 = scmp.eq.s32.totalorder %s14, 1
    %p32 = por %p30, %p31
    %p33 = scmp.ne.s32.totalorder %s22, %s23
    %p34 = scmp.eq.s32.totalorder %s14, 0
    %p35 = por %p33, %p34
    %p36 = scmp.ne.s32.totalorder %s22, %s23
    %p37 = scmp.eq.s32.totalorder %s15, 1
    %p38 = por %p36, %p37
    %p40 = scmp.ne.s32.totalorder %s23, %s39
    %p41 = scmp.eq.s32.totalorder %s15, 0
    %p42 = por %p40, %p41
    %s44 = sadd.s32 %s43, 1
    %p47 = scmp.eq.s32.totalorder %s9, 1
    %p48 = scmp.ne.s32.totalorder %s43, %s45
    %p49 = scmp.eq.s32.totalorder %s9, 0
    %p50 = por %p48, %p49
    %p51 = scmp.ne.s32.totalorder %s43, %s45
    %p52 = scmp.eq.s32.totalorder %s14, 1
    %p53 = por %p51, %p52
    %p54 = scmp.ne.s32.totalorder %s45, %s46
    %p55 = scmp.eq.s32.totalorder %s14, 0
    %p56 = por %p54, %p55
    %p57 = scmp.ne.s32.totalorder %s45, %s46
    %p58 = scmp.eq.s32.totalorder %s15, 1
    %p59 = por %p57, %p58
    %p61 = scmp.ne.s32.totalorder %s46, %s60
    %p62 = scmp.eq.s32.totalorder %s15, 0
    %p63 = por %p61, %p62
    %s65 = sadd.s32 %s64, 1
    %p68 = scmp.eq.s32.totalorder %s9, 1
    %p69 = scmp.ne.s32.totalorder %s64, %s66
    %p70 = scmp.eq.s32.totalorder %s9, 0
    %p71 = por %p69, %p70
    %p72 = scmp.ne.s32.totalorder %s64, %s66
    %p73 = scmp.eq.s32.totalorder %s14, 1
    %p74 = por %p72, %p73
    %p75 = scmp.ne.s32.totalorder %s66, %s67
    %p76 = scmp.eq.s32.totalorder %s14, 0
    %p77 = por %p75, %p76
    %p78 = scmp.ne.s32.totalorder %s66, %s67
    %p79 = scmp.eq.s32.totalorder %s15, 1
    %p80 = por %p78, %p79
    %p82 = scmp.ne.s32.totalorder %s67, %s81
    %p83 = scmp.eq.s32.totalorder %s15, 0
    %p84 = por %p82, %p83
    %s85 = ssub.s32 %s9, %s16
    %p86 = scmp.eq.s32.totalorder %s85, 0
    %s88 = sadd.s32 %s87, 1
    %s89 = scalar_select %p86, %s87, %s88
    %p92 = pneg %p86
    %p93 = scmp.eq.s32.totalorder %s9, 1
    %p94 = por %p92, %p93
    %p95 = scmp.ne.s32.totalorder %s87, %s90
    %p96 = scmp.eq.s32.totalorder %s9, 0
    %p97 = por %p95, %p96
    %p98 = scmp.ne.s32.totalorder %s87, %s90
    %p99 = scmp.eq.s32.totalorder %s14, 1
    %p100 = por %p98, %p99
    %p101 = scmp.ne.s32.totalorder %s90, %s91
    %p102 = scmp.eq.s32.totalorder %s14, 0
    %p103 = por %p101, %p102
    %p104 = scmp.ne.s32.totalorder %s90, %s91
    %p105 = scmp.eq.s32.totalorder %s15, 1
    %p106 = por %p104, %p105
    %p108 = scmp.ne.s32.totalorder %s91, %s107
    %p109 = scmp.eq.s32.totalorder %s15, 0
    %p110 = por %p108, %p109
    %p111 = scmp.le.s32.totalorder 1, %s9
    %p112 = scmp.lt.s32.totalorder %s9, 3
    %p113 = pnand %p111, %p112
    %p114 = pneg %p113
    // Predicated region
    $region9: #{net_forward.4} parent=5 // pred_check
      _
    $region10: #{net_forward.4} parent=5 // pred_check_branch
      %116 = sbr.rel (%p113) target = $region12
    $region11: #{net_forward.4} parent=5 // pred_region
      %s117 = ssub.s32 %s9, 1
      // Predicated region
      $region13: #{net_forward.4} parent=11 // pred_check
        %p118 = pneg %p56
      $region14: #{net_forward.4} parent=11 // pred_check_branch
        %120 = sbr.rel (%p118) target = $region16
      $region15: #{net_forward.4} parent=11 // pred_region
        _
      $region16: #{net_forward.4} parent=11 // pred_fallthru
        _
      // Predicated region
      $region17: #{net_forward.4} parent=11 // pred_check
        %p121 = pneg %p77
      $region18: #{net_forward.4} parent=11 // pred_check_branch
        %123 = sbr.rel (%p121) target = $region20
      $region19: #{net_forward.4} parent=11 // pred_region
        _
      $region20: #{net_forward.4} parent=11 // pred_fallthru
        _
    $region12: #{net_forward.4} parent=5 // pred_fallthru
      _
    %p124 = scmp.lt.s32.totalorder %s9, 2
    // Predicated region
    $region21: #{net_forward.4} parent=5 // pred_check
      %p125 = pneg %p124
    $region22: #{net_forward.4} parent=5 // pred_check_branch
      %127 = sbr.rel (%p125) target = $region24
    $region23: #{net_forward.4} parent=5 // pred_region
      // Predicated region
      $region25: #{net_forward.4} parent=23 // pred_check
        %p128 = pneg %p29
      $region26: #{net_forward.4} parent=23 // pred_check_branch
        %130 = sbr.rel (%p128) target = $region28
      $region27: #{net_forward.4} parent=23 // pred_region
        %p131 = scmp.lt.s32.totalorder %s9, 1
        %s132 = scalar_select %p131, %s9, 1
        %s133 = smul.addr %s132, 6
        %s134 = smul.addr %s133, 4
        %s135 = scalar_lea.vmem %s0, %s134
      $region28: #{net_forward.4} parent=23 // pred_fallthru
        _
    $region24: #{net_forward.4} parent=5 // pred_fallthru
      _
    %p136 = scmp.le.s32.totalorder 1, %s9
    %p137 = scmp.lt.s32.totalorder %s9, 3
    %p138 = pnand %p136, %p137
    %p139 = pneg %p138
    // Predicated region
    $region29: #{net_forward.4} parent=5 // pred_check
      _
    $region30: #{net_forward.4} parent=5 // pred_check_branch
      %141 = sbr.rel (%p138) target = $region32
    $region31: #{net_forward.4} parent=5 // pred_region
      %s142 = ssub.s32 %s9, 1
      %p143 = scmp.lt.s32.totalorder %s14, 1
      %s144 = scalar_select %p143, %s14, 1
      %s145 = smul.addr %s144, 6
      %s146 = smul.addr %s145, 4
      %s147 = scalar_lea.vmem %s0, %s146
      %p148 = pneg %p35
      %p149 = pneg %p32
      %p150 = pneg %p56
      %p151 = pneg %p53
      %p152 = pneg %p77
      %p153 = pneg %p74
      %p154 = pneg %p103
      %p155 = pneg %p100
      %p156 = scmp.lt.s32.totalorder %s14, 1
      %s157 = scalar_select %p156, %s14, 1
      %s158 = smul.addr %s157, 5
      %s159 = smul.addr %s158, 4
      %s160 = scalar_lea.vmem %s3, %s159
      %p161 = scmp.lt.s32.totalorder %s14, 1
      %s162 = scalar_select %p161, %s14, 1
      %s163 = smul.addr %s162, 6
      %s164 = smul.addr %s163, 4
      %s165 = scalar_lea.vmem %s0, %s164
      %p166 = scmp.lt.s32.totalorder %s14, 1
      %s167 = scalar_select %p166, %s14, 1
      %s168 = smul.addr %s167, 5
      %s169 = smul.addr %s168, 4
      %s170 = scalar_lea.vmem %s3, %s169
      %v172 = vld [vmem:[%s165] sm:$0xf]
      %v173 = vld [vmem:[%s165 + $0x4] sm:$0xf]
      %v174 = vld [vmem:[%s165 + $0x8] sm:$0xf]
      %v175 = vld [vmem:[%s165 + $0xc] sm:$0xf]
      %v176 = vld [vmem:[%s165 + $0x10] sm:$0xf]
      %v177 = vld [vmem:[%s165 + $0x14] sm:$0x3]
      %v178 = vld [vmem:[%s1] sm:$0xf]
      %v179 = vld [vmem:[%s1 + $0x4] sm:$0x3]
      %v180 = vld [vmem:[%s2] sm:$0x1]
      %v182 = vlaneseq
      %v183 = vshrl.u32 %v182, 7
      %v184 = vsub.s32 0, %v183
      %v185 = vrot.slane %v180, %v184
      %v193 = vunpack.c.l.b16 %v172
      %v194 = vunpack.c.l.b16 %v173
      %v195 = vunpack.c.l.b16 %v174
      %v196 = vunpack.c.l.b16 %v175
      %v197 = vunpack.c.l.b16 %v176
      %v198 = vunpack.c.l.b16 %v177
      %v199 = vpack.c.b16 %v194, %v193
      %v200 = vpack.c.b16 %v196, %v195
      %v201 = vpack.c.b16 %v198, %v197
      %v204 = vunpack.c.l.b16 %v178
      %v205 = vunpack.c.l.b16 %v179
      %v206 = vpack.c.b16 %v205, %v204
      %vm207 = vcmask 97280
      %v209 = vsel %vm207, %v199, 0
      %v212 = vsel %vm207, %v200, 0
      %v215 = vsel %vm207, %v201, 0
      %vm217 = vcmask 1045504
      %v219 = vsel %vm217, %v206, 0
      %221 = vmatprep.subr.bf16.mxu0 0
      %222 = vmatpush1.bf16.msra.mxu0 0
      %223 = vmatprep.subr.bf16.mxu0 0
      %224 = vmatpush1.bf16.msra.mxu0 0
      %225 = vmatprep.subr.bf16.mxu0 0
      %226 = vmatpush1.bf16.msra.mxu0 0
      %227 = vmatprep.subr.bf16.mxu0 0
      %228 = vmatpush1.bf16.msra.mxu0 0
      %229 = vmatprep.subr.bf16.mxu0 0
      %230 = vmatpush1.bf16.msra.mxu0 0
      %231 = vmatprep.subr.bf16.mxu0 0
      %232 = vmatpush1.bf16.msra.mxu0 0
      %233 = vmatprep.subr.bf16.mxu0 0
      %234 = vmatpush1.bf16.msra.mxu0 0
      %235 = vmatprep.subr.bf16.mxu0 0
      %236 = vmatpush1.bf16.msra.mxu0 %v219
      %237 = vmatprep.subr.bf16.mxu0 0
      %238 = vmatpush2.bf16.msra.mxu0 0
      %239 = vmatprep.subr.bf16.mxu0 0
      %240 = vmatpush2.bf16.msra.mxu0 0
      %241 = vmatprep.subr.bf16.mxu0 0
      %242 = vmatpush2.bf16.msra.mxu0 0
      %243 = vmatprep.subr.bf16.mxu0 0
      %244 = vmatpush2.bf16.msra.mxu0 0
      %245 = vmatprep.subr.bf16.mxu0 0
      %246 = vmatpush2.bf16.msra.mxu0 0
      %247 = vmatprep.subr.bf16.mxu0 0
      %248 = vmatpush2.bf16.msra.mxu0 0
      %249 = vmatprep.subr.bf16.mxu0 0
      %250 = vmatpush2.bf16.msra.mxu0 0
      %251 = vmatprep.subr.bf16.mxu0 0
      %252 = vmatpush2.bf16.msra.mxu0 0
      %253 = vmatprep.mubr.bf16.mxu0 0
      %254 = vmatmul.mubr.bf16.gmra.mxu0 %v209
      %v255 = vpop.f32.mrf.mxu0
      %v256 = vadd.f32 %v185, %v255
      %v257 = vpop.f32.mrf.mxu0
      %v258 = vpop.f32.mrf.mxu0
      %v259 = vadd.f32 %v185, %v258
      %v260 = vpop.f32.mrf.mxu0
      %261 = vmatprep.mubr.bf16.mxu0 0
      %262 = vmatmul.mubr.bf16.gmra.mxu0 %v212
      %v263 = vpop.f32.mrf.mxu0
      %v264 = vadd.f32 %v185, %v263
      %v265 = vpop.f32.mrf.mxu0
      %v266 = vpop.f32.mrf.mxu0
      %v267 = vadd.f32 %v185, %v266
      %v268 = vpop.f32.mrf.mxu0
      %269 = vmatprep.mubr.bf16.mxu0 0
      %270 = vmatmul.mubr.bf16.gmra.mxu0 %v215
      %v271 = vpop.f32.mrf.mxu0
      %v272 = vadd.f32 %v185, %v271
      %v273 = vpop.f32.mrf.mxu0
      %v274 = vpop.f32.mrf.mxu0
      %v275 = vadd.f32 %v185, %v274
      %v276 = vpop.f32.mrf.mxu0
      %277 = vdwg.mxu0
      %v278 = vmax.f32 %v256, 0.0
      %v279 = vmax.f32 %v259, 0.0
      %v280 = vmax.f32 %v264, 0.0
      %v281 = vmax.f32 %v267, 0.0
      %v282 = vmax.f32 %v272, 0.0
      %v283 = vmax.f32 %v275, 0.0
      %vm289 = vcmask 1046528
      %v290 = vrot.slane %v278, 1
      %v291 = vrot.slane %v279, 1
      %v292 = vsel %vm289, %v290, %v291
      %v293 = vrot.slane %v280, 1
      %v294 = vsel %vm289, %v291, %v293
      %v295 = vrot.slane %v281, 1
      %v296 = vsel %vm289, %v293, %v295
      %v297 = vrot.slane %v282, 1
      %v298 = vsel %vm289, %v295, %v297
      %v304 = vmax.f32 %v278, %v292
      %v305 = vmax.f32 %v279, %v294
      %v306 = vmax.f32 %v280, %v296
      %v307 = vmax.f32 %v281, %v298
      %v308 = vmax.f32 %v282, %v297
      %v310 = vrot.slane %v278, 2
      %v311 = vrot.slane %v279, 2
      %v312 = vsel %vm217, %v310, %v311
      %v313 = vrot.slane %v280, 2
      %v314 = vsel %vm217, %v311, %v313
      %v315 = vrot.slane %v281, 2
      %v316 = vsel %vm217, %v313, %v315
      %v317 = vrot.slane %v282, 2
      %v318 = vsel %vm217, %v315, %v317
      %v319 = vrot.slane %v283, 2
      %v320 = vsel %vm217, %v317, %v319
      %v326 = vmax.f32 %v304, %v312
      %v327 = vmax.f32 %v305, %v314
      %v328 = vmax.f32 %v306, %v316
      %v329 = vmax.f32 %v307, %v318
      %v330 = vmax.f32 %v308, %v320
      %vm331 = vcmask 1044480
      %v332 = vrot.slane %v278, 3
      %v333 = vrot.slane %v279, 3
      %v334 = vsel %vm331, %v332, %v333
      %v335 = vrot.slane %v280, 3
      %v336 = vsel %vm331, %v333, %v335
      %v337 = vrot.slane %v281, 3
      %v338 = vsel %vm331, %v335, %v337
      %v339 = vrot.slane %v282, 3
      %v340 = vsel %vm331, %v337, %v339
      %v341 = vrot.slane %v283, 3
      %v342 = vsel %vm331, %v339, %v341
      %v348 = vmax.f32 %v326, %v334
      %v349 = vmax.f32 %v327, %v336
      %v350 = vmax.f32 %v328, %v338
      %v351 = vmax.f32 %v329, %v340
      %v352 = vmax.f32 %v330, %v342
      %vm353 = vcmask 1043456
      %v354 = vrot.slane %v278, 4
      %v355 = vrot.slane %v279, 4
      %v356 = vsel %vm353, %v354, %v355
      %v357 = vrot.slane %v280, 4
      %v358 = vsel %vm353, %v355, %v357
      %v359 = vrot.slane %v281, 4
      %v360 = vsel %vm353, %v357, %v359
      %v361 = vrot.slane %v282, 4
      %v362 = vsel %vm353, %v359, %v361
      %v363 = vrot.slane %v283, 4
      %v364 = vsel %vm353, %v361, %v363
      %v370 = vmax.f32 %v348, %v356
      %v371 = vmax.f32 %v349, %v358
      %v372 = vmax.f32 %v350, %v360
      %v373 = vmax.f32 %v351, %v362
      %v374 = vmax.f32 %v352, %v364
      %v375 = vpack.c.bf16 %v371, %v370
      %v376 = vpack.c.bf16 %v373, %v372
      %v377 = vpack.c.bf16 %v374, %v374
      %v381 = vunpack.c.l.b16 %v375
      %v382 = vunpack.c.h.b16 %v375
      %v383 = vunpack.c.l.b16 %v376
      %v384 = vunpack.c.h.b16 %v376
      %v385 = vunpack.c.l.b16 %v377
      %v386 = vpack.c.b16 %v381, %v381
      %v387 = vpack.c.b16 %v382, %v382
      %v388 = vpack.c.b16 %v383, %v383
      %v389 = vpack.c.b16 %v384, %v384
      %v390 = vpack.c.b16 %v385, %v385
      %396 = vst [vmem:[%s170] sm:$0xf] %v386
      %397 = vst [vmem:[%s170 + $0x4] sm:$0xf] %v387
      %398 = vst [vmem:[%s170 + $0x8] sm:$0xf] %v388
      %399 = vst [vmem:[%s170 + $0xc] sm:$0xf] %v389
      %vm400 = vcmask 1043456
      %vm401 = vsmask.f32 3328
      %vm402 = vmand %vm400, %vm401
      %v403 = vld [vmem:[%s170 + $0x10] sm:$0xf]
      %v404 = vsel %vm402, %v390, %v403
      %405 = vst [vmem:[%s170 + $0x10] sm:$0xf] %v404
      %p406 = scmp.lt.s32.totalorder %s14, 1
      %s407 = scalar_select %p406, %s14, 1
      %s408 = smul.addr %s407, 5
      %s409 = smul.addr %s408, 4
      %s410 = scalar_lea.vmem %s3, %s409
      // Predicated region
      $region33: #{net_forward.4} parent=31 // pred_check
        %p411 = pneg %p100
      $region34: #{net_forward.4} parent=31 // pred_check_branch
        %413 = sbr.rel (%p411) target = $region36
      $region35: #{net_forward.4} parent=31 // pred_region
        _
      $region36: #{net_forward.4} parent=31 // pred_fallthru
        _
    $region32: #{net_forward.4} parent=5 // pred_fallthru
      _
    %p414 = scmp.le.s32.totalorder 2, %s9
    // Predicated region
    $region37: #{net_forward.4} parent=5 // pred_check
      %p415 = pneg %p414
    $region38: #{net_forward.4} parent=5 // pred_check_branch
      %417 = sbr.rel (%p415) target = $region40
    $region39: #{net_forward.4} parent=5 // pred_region
      %s418 = ssub.s32 %s9, 2
      // Predicated region
      $region41: #{net_forward.4} parent=39 // pred_check
        %p419 = pneg %p106
      $region42: #{net_forward.4} parent=39 // pred_check_branch
        %421 = sbr.rel (%p419) target = $region44
      $region43: #{net_forward.4} parent=39 // pred_region
        %p422 = scmp.lt.s32.totalorder %s15, 1
        %s423 = scalar_select %p422, %s15, 1
        %s424 = smul.addr %s423, 5
        %s425 = smul.addr %s424, 4
        %s426 = scalar_lea.vmem %s3, %s425
      $region44: #{net_forward.4} parent=39 // pred_fallthru
        _
    $region40: #{net_forward.4} parent=5 // pred_fallthru
      _
  $region6: #{net_forward.4} parent=0 // loop_footer
    %s13 = sadd.s32 1, %s9
  $region7: #{net_forward.4} parent=0 // loop_footer_branch
    %8 = sbr.rel target = $region3
  $region8: #{net_forward.4} parent=0 // loop_exit
    _

// kernel: net_forward.6
$region0: #{net_forward.6}
  #allocation0 [shape = 'u32[]', space=smem, size = 0x4, offset = 0x4, fixed_abs, tag = 'smem constant byte address 0x4 - core index']
  #allocation1 [shape = 'u32[144,128]{1,0:T(1,128)}', space=vmem, size = 0x12000, scoped, tag = 'internal scratch']
  #allocation2 [shape = 'f32[8,128]{1,0:T(8,128)}', space=vmem, size = 0x1000, scoped, tag = 'scratch operand']
  %s0 = inlined_call_operand.vmem [shape: bf16[8,4096], index: 0, kind: input, shape index: {}]
  %s1 = inlined_call_operand.vmem [shape: bf16[4096,128], index: 1, kind: input, shape index: {}]
  %s2 = inlined_call_operand.vmem [shape: f32[1,128], index: 2, kind: input, shape index: {}]
  %s3 = inlined_call_operand.vmem [shape: bf16[8,128], index: 3, kind: output, shape index: {}]
  %s4 = sld [smem:[#allocation0]]
  $region53: #{net_forward.6} parent=0
    _
  %s6 = ssub.s32 1, %s4
  %s7 = scalar_select 0, %s6, %s4
  loop: start=0, step=1, limit=10
  $region2: #{net_forward.6} parent=0 // loop_pre_header
    _
  $region3: #{net_forward.6} parent=0 // loop_header
    %s9 = sphi 0, %s13
    %p10 = scmp.ge.s32.totalorder %s9, 10
    %s16 = sphi 0, %s35
    %s17 = sphi 0, %s31
    %s18 = sphi 0, %s27
    %s19 = sphi 0, %s16
    %s20 = sphi 0, %s17
    %s21 = sphi 0, %s18
    %s22 = sphi 0, %s19
    %s23 = sphi 0, %s20
    %s24 = sphi 0, %s21
    %s40 = sphi 0, %s42
    %s43 = sphi 0, %s40
    %s44 = sphi 0, %s43
    %s60 = sphi 0, %s44
    %s68 = sphi 0, %s70
    %s71 = sphi 0, %s68
    %s72 = sphi 0, %s71
    %s88 = sphi 0, %s72
    %s94 = sphi 0, %s96
    %s97 = sphi 0, %s94
    %s98 = sphi 0, %s97
    %s114 = sphi 0, %s98
    %s122 = sphi 0, %s124
    %s125 = sphi 0, %s122
    %s126 = sphi 0, %s125
    %s142 = sphi 0, %s126
  $region4: #{net_forward.6} parent=0 // loop_header_branch
    %12 = sbr.rel (%p10) target = $region8
  $region5: #{net_forward.6} parent=0 // loop_body
    %s14 = ssub.s32 %s9, 1
    %s15 = ssub.s32 %s9, 2
    %s25 = sadd.s32 1, %s18
    %p26 = scmp.ge.s32.totalorder %s25, 8
    %s27 = scalar_select %p26, 0, %s25
    %s28 = sadd.s32 1, %s17
    %s29 = scalar_select %p26, %s28, %s17
    %p30 = scmp.ge.s32.totalorder %s29, 1
    %s31 = scalar_select %p30, 0, %s29
    %s32 = sadd.s32 1, %s16
    %s33 = scalar_select %p30, %s32, %s16
    %p34 = scmp.ge.s32.totalorder %s33, 1
    %s35 = scalar_select %p34, 0, %s33
    %s36 = ssub.s32 %s16, %s35
    %s37 = ssub.s32 %s18, %s27
    %s38 = sor.u32 %s36, %s37
    %p39 = scmp.eq.s32.totalorder %s38, 0
    %s41 = sadd.s32 %s40, 1
    %s42 = scalar_select %p39, %s40, %s41
    %p45 = pneg %p39
    %p46 = scmp.eq.s32.totalorder %s9, 7
    %p47 = por %p45, %p46
    %p48 = scmp.ne.s32.totalorder %s40, %s43
    %p49 = scmp.eq.s32.totalorder %s9, 0
    %p50 = por %p48, %p49
    %p51 = scmp.ne.s32.totalorder %s40, %s43
    %p52 = scmp.eq.s32.totalorder %s14, 7
    %p53 = por %p51, %p52
    %p54 = scmp.ne.s32.totalorder %s43, %s44
    %p55 = scmp.eq.s32.totalorder %s14, 0
    %p56 = por %p54, %p55
    %p57 = scmp.ne.s32.totalorder %s43, %s44
    %p58 = scmp.eq.s32.totalorder %s15, 7
    %p59 = por %p57, %p58
    %p61 = scmp.ne.s32.totalorder %s44, %s60
    %p62 = scmp.eq.s32.totalorder %s15, 0
    %p63 = por %p61, %p62
    %s64 = ssub.s32 %s18, %s27
    %s65 = ssub.s32 %s17, %s31
    %s66 = sor.u32 %s64, %s65
    %p67 = scmp.eq.s32.totalorder %s66, 0
    %s69 = sadd.s32 %s68, 1
    %s70 = scalar_select %p67, %s68, %s69
    %p73 = pneg %p67
    %p74 = scmp.eq.s32.totalorder %s9, 7
    %p75 = por %p73, %p74
    %p76 = scmp.ne.s32.totalorder %s68, %s71
    %p77 = scmp.eq.s32.totalorder %s9, 0
    %p78 = por %p76, %p77
    %p79 = scmp.ne.s32.totalorder %s68, %s71
    %p80 = scmp.eq.s32.totalorder %s14, 7
    %p81 = por %p79, %p80
    %p82 = scmp.ne.s32.totalorder %s71, %s72
    %p83 = scmp.eq.s32.totalorder %s14, 0
    %p84 = por %p82, %p83
    %p85 = scmp.ne.s32.totalorder %s71, %s72
    %p86 = scmp.eq.s32.totalorder %s15, 7
    %p87 = por %p85, %p86
    %p89 = scmp.ne.s32.totalorder %s72, %s88
    %p90 = scmp.eq.s32.totalorder %s15, 0
    %p91 = por %p89, %p90
    %s92 = ssub.s32 %s17, %s31
    %p93 = scmp.eq.s32.totalorder %s92, 0
    %s95 = sadd.s32 %s94, 1
    %s96 = scalar_select %p93, %s94, %s95
    %p99 = pneg %p93
    %p100 = scmp.eq.s32.totalorder %s9, 7
    %p101 = por %p99, %p100
    %p102 = scmp.ne.s32.totalorder %s94, %s97
    %p103 = scmp.eq.s32.totalorder %s9, 0
    %p104 = por %p102, %p103
    %p105 = scmp.ne.s32.totalorder %s94, %s97
    %p106 = scmp.eq.s32.totalorder %s14, 7
    %p107 = por %p105, %p106
    %p108 = scmp.ne.s32.totalorder %s97, %s98
    %p109 = scmp.eq.s32.totalorder %s14, 0
    %p110 = por %p108, %p109
    %p111 = scmp.ne.s32.totalorder %s97, %s98
    %p112 = scmp.eq.s32.totalorder %s15, 7
    %p113 = por %p111, %p112
    %p115 = scmp.ne.s32.totalorder %s98, %s114
    %p116 = scmp.eq.s32.totalorder %s15, 0
    %p117 = por %p115, %p116
    %s118 = ssub.s32 %s16, %s35
    %s119 = ssub.s32 %s17, %s31
    %s120 = sor.u32 %s118, %s119
    %p121 = scmp.eq.s32.totalorder %s120, 0
    %s123 = sadd.s32 %s122, 1
    %s124 = scalar_select %p121, %s122, %s123
    %p127 = pneg %p121
    %p128 = scmp.eq.s32.totalorder %s9, 7
    %p129 = por %p127, %p128
    %p130 = scmp.ne.s32.totalorder %s122, %s125
    %p131 = scmp.eq.s32.totalorder %s9, 0
    %p132 = por %p130, %p131
    %p133 = scmp.ne.s32.totalorder %s122, %s125
    %p134 = scmp.eq.s32.totalorder %s14, 7
    %p135 = por %p133, %p134
    %p136 = scmp.ne.s32.totalorder %s125, %s126
    %p137 = scmp.eq.s32.totalorder %s14, 0
    %p138 = por %p136, %p137
    %p139 = scmp.ne.s32.totalorder %s125, %s126
    %p140 = scmp.eq.s32.totalorder %s15, 7
    %p141 = por %p139, %p140
    %p143 = scmp.ne.s32.totalorder %s126, %s142
    %p144 = scmp.eq.s32.totalorder %s15, 0
    %p145 = por %p143, %p144
    %p146 = scmp.le.s32.totalorder 1, %s9
    %p147 = scmp.lt.s32.totalorder %s9, 9
    %p148 = pnand %p146, %p147
    %p149 = pneg %p148
    // Predicated region
    $region9: #{net_forward.6} parent=5 // pred_check
      _
    $region10: #{net_forward.6} parent=5 // pred_check_branch
      %151 = sbr.rel (%p148) target = $region12
    $region11: #{net_forward.6} parent=5 // pred_region
      %s152 = ssub.s32 %s9, 1
      // Predicated region
      $region13: #{net_forward.6} parent=11 // pred_check
        %p153 = pneg %p110
      $region14: #{net_forward.6} parent=11 // pred_check_branch
        %155 = sbr.rel (%p153) target = $region16
      $region15: #{net_forward.6} parent=11 // pred_region
        %p156 = scmp.lt.s32.totalorder %s20, 0
        %s157 = scalar_select %p156, %s20, 0
        %s158 = scalar_lea.vmem %s2, %s157
      $region16: #{net_forward.6} parent=11 // pred_fallthru
        _
    $region12: #{net_forward.6} parent=5 // pred_fallthru
      _
    %p159 = scmp.lt.s32.totalorder %s9, 8
    // Predicated region
    $region17: #{net_forward.6} parent=5 // pred_check
      %p160 = pneg %p159
    $region18: #{net_forward.6} parent=5 // pred_check_branch
      %162 = sbr.rel (%p160) target = $region20
    $region19: #{net_forward.6} parent=5 // pred_region
      // Predicated region
      $region21: #{net_forward.6} parent=19 // pred_check
        %p163 = pneg %p50
      $region22: #{net_forward.6} parent=19 // pred_check_branch
        %165 = sbr.rel (%p163) target = $region24
      $region23: #{net_forward.6} parent=19 // pred_region
        %s166 = smul.u32 4, %s18
        %p167 = scmp.lt.s32.totalorder %s16, 0
        %s168 = scalar_select %p167, %s16, 0
        %p169 = scmp.lt.s32.totalorder %s166, 31
        %s170 = scalar_select %p169, %s166, 31
        %s171 = smul.addr %s168, 32
        %s172 = sadd.s32 %s170, %s171
        %s173 = smul.addr %s172, 4
        %s174 = scalar_lea.vmem %s0, %s173
        %s175 = smul.u32 4, %s18
      $region24: #{net_forward.6} parent=19 // pred_fallthru
        _
      // Predicated region
      $region25: #{net_forward.6} parent=19 // pred_check
        %p176 = pneg %p78
      $region26: #{net_forward.6} parent=19 // pred_check_branch
        %178 = sbr.rel (%p176) target = $region28
      $region27: #{net_forward.6} parent=19 // pred_region
        %s179 = smul.u32 64, %s18
        %p180 = scmp.lt.s32.totalorder %s179, 511
        %s181 = scalar_select %p180, %s179, 511
        %p182 = scmp.lt.s32.totalorder %s17, 0
        %s183 = scalar_select %p182, %s17, 0
        %s184 = sadd.s32 %s183, %s181
        %s185 = smul.addr %s184, 4
        %s186 = scalar_lea.vmem %s1, %s185
        %s187 = smul.u32 64, %s18
      $region28: #{net_forward.6} parent=19 // pred_fallthru
        _
    $region20: #{net_forward.6} parent=5 // pred_fallthru
      _
    %p188 = scmp.le.s32.totalorder 1, %s9
    %p189 = scmp.lt.s32.totalorder %s9, 9
    %p190 = pnand %p188, %p189
    %p191 = pneg %p190
    // Predicated region
    $region29: #{net_forward.6} parent=5 // pred_check
      _
    $region30: #{net_forward.6} parent=5 // pred_check_branch
      %193 = sbr.rel (%p190) target = $region32
    $region31: #{net_forward.6} parent=5 // pred_region
      %s194 = ssub.s32 %s9, 1
      %s195 = smul.u32 4, %s21
      %p196 = scmp.lt.s32.totalorder %s19, 0
      %s197 = scalar_select %p196, %s19, 0
      %p198 = scmp.lt.s32.totalorder %s195, 31
      %s199 = scalar_select %p198, %s195, 31
      %s200 = smul.addr %s197, 32
      %s201 = sadd.s32 %s199, %s200
      %s202 = smul.addr %s201, 4
      %s203 = scalar_lea.vmem %s0, %s202
      %p204 = pneg %p56
      %p205 = pneg %p53
      %s206 = smul.u32 64, %s21
      %p207 = scmp.lt.s32.totalorder %s206, 511
      %s208 = scalar_select %p207, %s206, 511
      %p209 = scmp.lt.s32.totalorder %s20, 0
      %s210 = scalar_select %p209, %s20, 0
      %s211 = sadd.s32 %s210, %s208
      %s212 = smul.addr %s211, 4
      %s213 = scalar_lea.vmem %s1, %s212
      %p214 = pneg %p84
      %p215 = pneg %p81
      %p216 = scmp.lt.s32.totalorder %s20, 0
      %s217 = scalar_select %p216, %s20, 0
      %s218 = scalar_lea.vmem %s2, %s217
      %p219 = pneg %p110
      %p220 = pneg %p107
      %p221 = pneg %p138
      %p222 = pneg %p135
      %p223 = scmp.lt.s32.totalorder %s19, 0
      %s224 = scalar_select %p223, %s19, 0
      %p225 = scmp.lt.s32.totalorder %s20, 0
      %s226 = scalar_select %p225, %s20, 0
      %s227 = sadd.s32 %s226, %s224
      %s228 = smul.addr %s227, 4
      %s229 = scalar_lea.vmem %s3, %s228
      %s230 = smul.u32 4, %s21
      %p231 = scmp.lt.s32.totalorder %s19, 0
      %s232 = scalar_select %p231, %s19, 0
      %p233 = scmp.lt.s32.totalorder %s230, 31
      %s234 = scalar_select %p233, %s230, 31
      %s235 = smul.addr %s232, 32
      %s236 = sadd.s32 %s234, %s235
      %s237 = smul.addr %s236, 4
      %s238 = scalar_lea.vmem %s0, %s237
      %s239 = smul.u32 4, %s21
      %s240 = smul.u32 64, %s21
      %p241 = scmp.lt.s32.totalorder %s240, 511
      %s242 = scalar_select %p241, %s240, 511
      %p243 = scmp.lt.s32.totalorder %s20, 0
      %s244 = scalar_select %p243, %s20, 0
      %s245 = sadd.s32 %s244, %s242
      %s246 = smul.addr %s245, 4
      %s247 = scalar_lea.vmem %s1, %s246
      %s248 = smul.u32 64, %s21
      %p249 = scmp.lt.s32.totalorder %s20, 0
      %s250 = scalar_select %p249, %s20, 0
      %s251 = scalar_lea.vmem %s2, %s250
      %p252 = scmp.lt.s32.totalorder %s19, 0
      %s253 = scalar_select %p252, %s19, 0
      %p254 = scmp.lt.s32.totalorder %s20, 0
      %s255 = scalar_select %p254, %s20, 0
      %s256 = sadd.s32 %s255, %s253
      %s257 = smul.addr %s256, 4
      %s258 = scalar_lea.vmem %s3, %s257
      %p260 = scmp.eq.s32.totalorder %s21, 0
      // Predicated region
      $region33: #{net_forward.6} parent=31 // pred_check
        %p261 = pneg %p260
      $region34: #{net_forward.6} parent=31 // pred_check_branch
        %263 = sbr.rel (%p261) target = $region36
      $region35: #{net_forward.6} parent=31 // pred_region
        %264 = vst [vmem:[#allocation2] sm:$0xff] 0.0
      $region36: #{net_forward.6} parent=31 // pred_fallthru
        _
      %v265 = vld [vmem:[#allocation2] sm:$0xff]
      %v266 = vld [vmem:[%s238] sm:$0xff]
      %v267 = vld [vmem:[%s238 + $0x8] sm:$0xff]
      %v268 = vld [vmem:[%s247] sm:$0xf]
      %v269 = vld [vmem:[%s247 + $0x4] sm:$0xf]
      %v270 = vld [vmem:[%s247 + $0x8] sm:$0xf]
      %v271 = vld [vmem:[%s247 + $0xc] sm:$0xf]
      %v272 = vld [vmem:[%s247 + $0x10] sm:$0xf]
      %v273 = vld [vmem:[%s247 + $0x14] sm:$0xf]
      %v274 = vld [vmem:[%s247 + $0x18] sm:$0xf]
      %v275 = vld [vmem:[%s247 + $0x1c] sm:$0xf]
      %v276 = vld [vmem:[%s247 + $0x20] sm:$0xf]
      %v277 = vld [vmem:[%s247 + $0x24] sm:$0xf]
      %v278 = vld [vmem:[%s247 + $0x28] sm:$0xf]
      %v279 = vld [vmem:[%s247 + $0x2c] sm:$0xf]
      %v280 = vld [vmem:[%s247 + $0x30] sm:$0xf]
      %v281 = vld [vmem:[%s247 + $0x34] sm:$0xf]
      %v282 = vld [vmem:[%s247 + $0x38] sm:$0xf]
      %v283 = vld [vmem:[%s247 + $0x3c] sm:$0xf]
      %v284 = vld [vmem:[%s247 + $0x40] sm:$0xf]
      %v285 = vld [vmem:[%s247 + $0x44] sm:$0xf]
      %v286 = vld [vmem:[%s247 + $0x48] sm:$0xf]
      %v287 = vld [vmem:[%s247 + $0x4c] sm:$0xf]
      %v288 = vld [vmem:[%s247 + $0x50] sm:$0xf]
      %v289 = vld [vmem:[%s247 + $0x54] sm:$0xf]
      %v290 = vld [vmem:[%s247 + $0x58] sm:$0xf]
      %v291 = vld [vmem:[%s247 + $0x5c] sm:$0xf]
      %v292 = vld [vmem:[%s247 + $0x60] sm:$0xf]
      %v293 = vld [vmem:[%s247 + $0x64] sm:$0xf]
      %v294 = vld [vmem:[%s247 + $0x68] sm:$0xf]
      %v295 = vld [vmem:[%s247 + $0x6c] sm:$0xf]
      %v296 = vld [vmem:[%s247 + $0x70] sm:$0xf]
      %v297 = vld [vmem:[%s247 + $0x74] sm:$0xf]
      %v298 = vld [vmem:[%s247 + $0x78] sm:$0xf]
      %v299 = vld [vmem:[%s247 + $0x7c] sm:$0xf]
      %v300 = vld [vmem:[%s247 + $0x80] sm:$0xf]
      %v301 = vld [vmem:[%s247 + $0x84] sm:$0xf]
      %v302 = vld [vmem:[%s247 + $0x88] sm:$0xf]
      %v303 = vld [vmem:[%s247 + $0x8c] sm:$0xf]
      %v304 = vld [vmem:[%s247 + $0x90] sm:$0xf]
      %v305 = vld [vmem:[%s247 + $0x94] sm:$0xf]
      %v306 = vld [vmem:[%s247 + $0x98] sm:$0xf]
      %v307 = vld [vmem:[%s247 + $0x9c] sm:$0xf]
      %v308 = vld [vmem:[%s247 + $0xa0] sm:$0xf]
      %v309 = vld [vmem:[%s247 + $0xa4] sm:$0xf]
      %v310 = vld [vmem:[%s247 + $0xa8] sm:$0xf]
      %v311 = vld [vmem:[%s247 + $0xac] sm:$0xf]
      %v312 = vld [vmem:[%s247 + $0xb0] sm:$0xf]
      %v313 = vld [vmem:[%s247 + $0xb4] sm:$0xf]
      %v314 = vld [vmem:[%s247 + $0xb8] sm:$0xf]
      %v315 = vld [vmem:[%s247 + $0xbc] sm:$0xf]
      %v316 = vld [vmem:[%s247 + $0xc0] sm:$0xf]
      %v317 = vld [vmem:[%s247 + $0xc4] sm:$0xf]
      %v318 = vld [vmem:[%s247 + $0xc8] sm:$0xf]
      %v319 = vld [vmem:[%s247 + $0xcc] sm:$0xf]
      %v320 = vld [vmem:[%s247 + $0xd0] sm:$0xf]
      %v321 = vld [vmem:[%s247 + $0xd4] sm:$0xf]
      %v322 = vld [vmem:[%s247 + $0xd8] sm:$0xf]
      %v323 = vld [vmem:[%s247 + $0xdc] sm:$0xf]
      %v324 = vld [vmem:[%s247 + $0xe0] sm:$0xf]
      %v325 = vld [vmem:[%s247 + $0xe4] sm:$0xf]
      %v326 = vld [vmem:[%s247 + $0xe8] sm:$0xf]
      %v327 = vld [vmem:[%s247 + $0xec] sm:$0xf]
      %v328 = vld [vmem:[%s247 + $0xf0] sm:$0xf]
      %v329 = vld [vmem:[%s247 + $0xf4] sm:$0xf]
      %v330 = vld [vmem:[%s247 + $0xf8] sm:$0xf]
      %v331 = vld [vmem:[%s247 + $0xfc] sm:$0xf]
      %v334 = vunpack.c.l.b16 %v266
      %v335 = vunpack.c.h.b16 %v266
      %v336 = vunpack.c.l.b16 %v267
      %v337 = vunpack.c.h.b16 %v267
      %v338 = vpack.c.b16 %v334, %v334
      %v339 = vpack.c.b16 %v335, %v335
      %v340 = vpack.c.b16 %v336, %v336
      %v341 = vpack.c.b16 %v337, %v337
      %v410 = vunpack.c.l.b16 %v268
      %v411 = vunpack.c.l.b16 %v269
      %v412 = vunpack.c.l.b16 %v270
      %v413 = vunpack.c.l.b16 %v271
      %v414 = vunpack.c.l.b16 %v272
      %v415 = vunpack.c.l.b16 %v273
      %v416 = vunpack.c.l.b16 %v274
      %v417 = vunpack.c.l.b16 %v275
      %v418 = vunpack.c.l.b16 %v276
      %v419 = vunpack.c.l.b16 %v277
      %v420 = vunpack.c.l.b16 %v278
      %v421 = vunpack.c.l.b16 %v279
      %v422 = vunpack.c.l.b16 %v280
      %v423 = vunpack.c.l.b16 %v281
      %v424 = vunpack.c.l.b16 %v282
      %v425 = vunpack.c.l.b16 %v283
      %v426 = vunpack.c.l.b16 %v284
      %v427 = vunpack.c.l.b16 %v285
      %v428 = vunpack.c.l.b16 %v286
      %v429 = vunpack.c.l.b16 %v287
      %v430 = vunpack.c.l.b16 %v288
      %v431 = vunpack.c.l.b16 %v289
      %v432 = vunpack.c.l.b16 %v290
      %v433 = vunpack.c.l.b16 %v291
      %v434 = vunpack.c.l.b16 %v292
      %v435 = vunpack.c.l.b16 %v293
      %v436 = vunpack.c.l.b16 %v294
      %v437 = vunpack.c.l.b16 %v295
      %v438 = vunpack.c.l.b16 %v296
      %v439 = vunpack.c.l.b16 %v297
      %v440 = vunpack.c.l.b16 %v298
      %v441 = vunpack.c.l.b16 %v299
      %v442 = vunpack.c.l.b16 %v300
      %v443 = vunpack.c.l.b16 %v301
      %v444 = vunpack.c.l.b16 %v302
      %v445 = vunpack.c.l.b16 %v303
      %v446 = vunpack.c.l.b16 %v304
      %v447 = vunpack.c.l.b16 %v305
      %v448 = vunpack.c.l.b16 %v306
      %v449 = vunpack.c.l.b16 %v307
      %v450 = vunpack.c.l.b16 %v308
      %v451 = vunpack.c.l.b16 %v309
      %v452 = vunpack.c.l.b16 %v310
      %v453 = vunpack.c.l.b16 %v311
      %v454 = vunpack.c.l.b16 %v312
      %v455 = vunpack.c.l.b16 %v313
      %v456 = vunpack.c.l.b16 %v314
      %v457 = vunpack.c.l.b16 %v315
      %v458 = vunpack.c.l.b16 %v316
      %v459 = vunpack.c.l.b16 %v317
      %v460 = vunpack.c.l.b16 %v318
      %v461 = vunpack.c.l.b16 %v319
      %v462 = vunpack.c.l.b16 %v320
      %v463 = vunpack.c.l.b16 %v321
      %v464 = vunpack.c.l.b16 %v322
      %v465 = vunpack.c.l.b16 %v323
      %v466 = vunpack.c.l.b16 %v324
      %v467 = vunpack.c.l.b16 %v325
      %v468 = vunpack.c.l.b16 %v326
      %v469 = vunpack.c.l.b16 %v327
      %v470 = vunpack.c.l.b16 %v328
      %v471 = vunpack.c.l.b16 %v329
      %v472 = vunpack.c.l.b16 %v330
      %v473 = vunpack.c.l.b16 %v331
      %v474 = vpack.c.b16 %v411, %v410
      %v475 = vpack.c.b16 %v413, %v412
      %v476 = vpack.c.b16 %v415, %v414
      %v477 = vpack.c.b16 %v417, %v416
      %v478 = vpack.c.b16 %v419, %v418
      %v479 = vpack.c.b16 %v421, %v420
      %v480 = vpack.c.b16 %v423, %v422
      %v481 = vpack.c.b16 %v425, %v424
      %v482 = vpack.c.b16 %v427, %v426
      %v483 = vpack.c.b16 %v429, %v428
      %v484 = vpack.c.b16 %v431, %v430
      %v485 = vpack.c.b16 %v433, %v432
      %v486 = vpack.c.b16 %v435, %v434
      %v487 = vpack.c.b16 %v437, %v436
      %v488 = vpack.c.b16 %v439, %v438
      %v489 = vpack.c.b16 %v441, %v440
      %v490 = vpack.c.b16 %v443, %v442
      %v491 = vpack.c.b16 %v445, %v444
      %v492 = vpack.c.b16 %v447, %v446
      %v493 = vpack.c.b16 %v449, %v448
      %v494 = vpack.c.b16 %v451, %v450
      %v495 = vpack.c.b16 %v453, %v452
      %v496 = vpack.c.b16 %v455, %v454
      %v497 = vpack.c.b16 %v457, %v456
      %v498 = vpack.c.b16 %v459, %v458
      %v499 = vpack.c.b16 %v461, %v460
      %v500 = vpack.c.b16 %v463, %v462
      %v501 = vpack.c.b16 %v465, %v464
      %v502 = vpack.c.b16 %v467, %v466
      %v503 = vpack.c.b16 %v469, %v468
      %v504 = vpack.c.b16 %v471, %v470
      %v505 = vpack.c.b16 %v473, %v472
      %538 = vmatprep.subr.bf16.mxu0 0
      %539 = vmatpush1.bf16.msra.mxu0 %v481
      %540 = vmatprep.subr.bf16.mxu0 0
      %541 = vmatpush1.bf16.msra.mxu0 %v480
      %542 = vmatprep.subr.bf16.mxu0 0
      %543 = vmatpush1.bf16.msra.mxu0 %v479
      %544 = vmatprep.subr.bf16.mxu0 0
      %545 = vmatpush1.bf16.msra.mxu0 %v478
      %546 = vmatprep.subr.bf16.mxu0 0
      %547 = vmatpush1.bf16.msra.mxu0 %v477
      %548 = vmatprep.subr.bf16.mxu0 0
      %549 = vmatpush1.bf16.msra.mxu0 %v476
      %550 = vmatprep.subr.bf16.mxu0 0
      %551 = vmatpush1.bf16.msra.mxu0 %v475
      %552 = vmatprep.subr.bf16.mxu0 0
      %553 = vmatpush1.bf16.msra.mxu0 %v474
      %554 = vmatprep.subr.bf16.mxu0 0
      %555 = vmatpush2.bf16.msra.mxu0 %v489
      %556 = vmatprep.subr.bf16.mxu0 0
      %557 = vmatpush2.bf16.msra.mxu0 %v488
      %558 = vmatprep.subr.bf16.mxu0 0
      %559 = vmatpush2.bf16.msra.mxu0 %v487
      %560 = vmatprep.subr.bf16.mxu0 0
      %561 = vmatpush2.bf16.msra.mxu0 %v486
      %562 = vmatprep.subr.bf16.mxu0 0
      %563 = vmatpush2.bf16.msra.mxu0 %v485
      %564 = vmatprep.subr.bf16.mxu0 0
      %565 = vmatpush2.bf16.msra.mxu0 %v484
      %566 = vmatprep.subr.bf16.mxu0 0
      %567 = vmatpush2.bf16.msra.mxu0 %v483
      %568 = vmatprep.subr.bf16.mxu0 0
      %569 = vmatpush2.bf16.msra.mxu0 %v482
      %570 = vmatprep.mubr.bf16.mxu0 %v339
      %571 = vmatmul.mubr.bf16.gmra.mxu0 %v338
      %v572 = vpop.f32.mrf.mxu0
      %v573 = vadd.f32 0.0, %v572
      %v574 = vpop.f32.mrf.mxu0
      %v575 = vpop.f32.mrf.mxu0
      %v576 = vpop.f32.mrf.mxu0
      %577 = vdwg.mxu0
      %578 = vmatprep.subr.bf16.mxu0 0
      %579 = vmatpush1.bf16.msra.mxu0 %v497
      %580 = vmatprep.subr.bf16.mxu0 0
      %581 = vmatpush1.bf16.msra.mxu0 %v496
      %582 = vmatprep.subr.bf16.mxu0 0
      %583 = vmatpush1.bf16.msra.mxu0 %v495
      %584 = vmatprep.subr.bf16.mxu0 0
      %585 = vmatpush1.bf16.msra.mxu0 %v494
      %586 = vmatprep.subr.bf16.mxu0 0
      %587 = vmatpush1.bf16.msra.mxu0 %v493
      %588 = vmatprep.subr.bf16.mxu0 0
      %589 = vmatpush1.bf16.msra.mxu0 %v492
      %590 = vmatprep.subr.bf16.mxu0 0
      %591 = vmatpush1.bf16.msra.mxu0 %v491
      %592 = vmatprep.subr.bf16.mxu0 0
      %593 = vmatpush1.bf16.msra.mxu0 %v490
      %594 = vmatprep.subr.bf16.mxu0 0
      %595 = vmatpush2.bf16.msra.mxu0 %v505
      %596 = vmatprep.subr.bf16.mxu0 0
      %597 = vmatpush2.bf16.msra.mxu0 %v504
      %598 = vmatprep.subr.bf16.mxu0 0
      %599 = vmatpush2.bf16.msra.mxu0 %v503
      %600 = vmatprep.subr.bf16.mxu0 0
      %601 = vmatpush2.bf16.msra.mxu0 %v502
      %602 = vmatprep.subr.bf16.mxu0 0
      %603 = vmatpush2.bf16.msra.mxu0 %v501
      %604 = vmatprep.subr.bf16.mxu0 0
      %605 = vmatpush2.bf16.msra.mxu0 %v500
      %606 = vmatprep.subr.bf16.mxu0 0
      %607 = vmatpush2.bf16.msra.mxu0 %v499
      %608 = vmatprep.subr.bf16.mxu0 0
      %609 = vmatpush2.bf16.msra.mxu0 %v498
      %610 = vmatprep.mubr.bf16.mxu0 %v341
      %611 = vmatmul.mubr.bf16.gmra.mxu0 %v340
      %v612 = vpop.f32.mrf.mxu0
      %v613 = vadd.f32 %v573, %v612
      %v614 = vpop.f32.mrf.mxu0
      %v615 = vpop.f32.mrf.mxu0
      %v616 = vpop.f32.mrf.mxu0
      %617 = vdwg.mxu0
      %v618 = vadd.f32 %v265, %v613
      %619 = vst [vmem:[#allocation2] sm:$0xff] %v618
      %p620 = scmp.eq.s32.totalorder %s21, 7
      // Predicated region
      $region37: #{net_forward.6} parent=31 // pred_check
        %p621 = pneg %p620
      $region38: #{net_forward.6} parent=31 // pred_check_branch
        %623 = sbr.rel (%p621) target = $region40
      $region39: #{net_forward.6} parent=31 // pred_region
        %v624 = vld [vmem:[#allocation2] sm:$0xff]
        %v625 = vld [vmem:[%s251] sm:$0x1]
        %v627 = vlaneseq
        %v628 = vshrl.u32 %v627, 7
        %v629 = vsub.s32 0, %v628
        %v630 = vrot.slane %v625, %v629
        %v632 = vadd.f32 %v624, %v630
        %v633 = vmax.f32 %v632, 0.0
        %v634 = vpack.c.bf16 %v633, %v633
        %635 = vst [vmem:[%s258] sm:$0xf] %v634
      $region40: #{net_forward.6} parent=31 // pred_fallthru
        _
      %p636 = scmp.lt.s32.totalorder %s19, 0
      %s637 = scalar_select %p636, %s19, 0
      %p638 = scmp.lt.s32.totalorder %s20, 0
      %s639 = scalar_select %p638, %s20, 0
      %s640 = sadd.s32 %s639, %s637
      %s641 = smul.addr %s640, 4
      %s642 = scalar_lea.vmem %s3, %s641
      // Predicated region
      $region41: #{net_forward.6} parent=31 // pred_check
        %p643 = pneg %p135
      $region42: #{net_forward.6} parent=31 // pred_check_branch
        %645 = sbr.rel (%p643) target = $region44
      $region43: #{net_forward.6} parent=31 // pred_region
        _
      $region44: #{net_forward.6} parent=31 // pred_fallthru
        _
      // Predicated region
      $region45: #{net_forward.6} parent=31 // pred_check
        %p646 = pneg %p135
      $region46: #{net_forward.6} parent=31 // pred_check_branch
        %648 = sbr.rel (%p646) target = $region48
      $region47: #{net_forward.6} parent=31 // pred_region
        %p649 = scmp.lt.s32.totalorder %s19, 0
        %s650 = scalar_select %p649, %s19, 0
        %p651 = scmp.lt.s32.totalorder %s20, 0
        %s652 = scalar_select %p651, %s20, 0
        %s653 = sadd.s32 %s652, %s650
        %s654 = smul.addr %s653, 4
        %s655 = scalar_lea.vmem %s3, %s654
      $region48: #{net_forward.6} parent=31 // pred_fallthru
        _
    $region32: #{net_forward.6} parent=5 // pred_fallthru
      _
    %p656 = scmp.le.s32.totalorder 2, %s9
    // Predicated region
    $region49: #{net_forward.6} parent=5 // pred_check
      %p657 = pneg %p656
    $region50: #{net_forward.6} parent=5 // pred_check_branch
      %659 = sbr.rel (%p657) target = $region52
    $region51: #{net_forward.6} parent=5 // pred_region
      %s660 = ssub.s32 %s9, 2
    $region52: #{net_forward.6} parent=5 // pred_fallthru
      _
  $region6: #{net_forward.6} parent=0 // loop_footer
    %s13 = sadd.s32 1, %s9
  $region7: #{net_forward.6} parent=0 // loop_footer_branch
    %8 = sbr.rel target = $region3
  $region8: #{net_forward.6} parent=0 // loop_exit
    _

// kernel: net_forward.5
$region0: #{net_forward.5}
  #allocation0 [shape = 'u32[]', space=smem, size = 0x4, offset = 0x4, fixed_abs, tag = 'smem constant byte address 0x4 - core index']
  #allocation1 [shape = 'u32[144,128]{1,0:T(1,128)}', space=vmem, size = 0x12000, scoped, tag = 'internal scratch']
  %s0 = inlined_call_operand.vmem [shape: bf16[2,39,128], index: 0, kind: input, shape index: {}]
  %s1 = inlined_call_operand.vmem [shape: bf16[4,128,128], index: 1, kind: input, shape index: {}]
  %s2 = inlined_call_operand.vmem [shape: f32[1,128], index: 2, kind: input, shape index: {}]
  %s3 = inlined_call_operand.vmem [shape: bf16[2,32,128], index: 3, kind: output, shape index: {}]
  %s4 = sld [smem:[#allocation0]]
  $region45: #{net_forward.5} parent=0
    _
  %s6 = ssub.s32 1, %s4
  %s7 = scalar_select 0, %s6, %s4
  loop: start=0, step=1, limit=4
  $region2: #{net_forward.5} parent=0 // loop_pre_header
    _
  $region3: #{net_forward.5} parent=0 // loop_header
    %s9 = sphi 0, %s13
    %p10 = scmp.ge.s32.totalorder %s9, 4
    %s19 = sphi 0, %s21
    %s22 = sphi 0, %s19
    %s23 = sphi 0, %s22
    %s39 = sphi 0, %s23
    %s43 = sphi 0, %s43
    %s45 = sphi 0, %s43
    %s46 = sphi 0, %s45
    %s60 = sphi 0, %s46
    %s64 = sphi 0, %s64
    %s66 = sphi 0, %s64
    %s67 = sphi 0, %s66
    %s81 = sphi 0, %s67
    %s87 = sphi 0, %s89
    %s90 = sphi 0, %s87
    %s91 = sphi 0, %s90
    %s107 = sphi 0, %s91
  $region4: #{net_forward.5} parent=0 // loop_header_branch
    %12 = sbr.rel (%p10) target = $region8
  $region5: #{net_forward.5} parent=0 // loop_body
    %s14 = ssub.s32 %s9, 1
    %s15 = ssub.s32 %s9, 2
    %s16 = sadd.s32 %s9, 1
    %s17 = ssub.s32 %s9, %s16
    %p18 = scmp.eq.s32.totalorder %s17, 0
    %s20 = sadd.s32 %s19, 1
    %s21 = scalar_select %p18, %s19, %s20
    %p24 = pneg %p18
    %p25 = scmp.eq.s32.totalorder %s9, 1
    %p26 = por %p24, %p25
    %p27 = scmp.ne.s32.totalorder %s19, %s22
    %p28 = scmp.eq.s32.totalorder %s9, 0
    %p29 = por %p27, %p28
    %p30 = scmp.ne.s32.totalorder %s19, %s22
    %p31 = scmp.eq.s32.totalorder %s14, 1
    %p32 = por %p30, %p31
    %p33 = scmp.ne.s32.totalorder %s22, %s23
    %p34 = scmp.eq.s32.totalorder %s14, 0
    %p35 = por %p33, %p34
    %p36 = scmp.ne.s32.totalorder %s22, %s23
    %p37 = scmp.eq.s32.totalorder %s15, 1
    %p38 = por %p36, %p37
    %p40 = scmp.ne.s32.totalorder %s23, %s39
    %p41 = scmp.eq.s32.totalorder %s15, 0
    %p42 = por %p40, %p41
    %s44 = sadd.s32 %s43, 1
    %p47 = scmp.eq.s32.totalorder %s9, 1
    %p48 = scmp.ne.s32.totalorder %s43, %s45
    %p49 = scmp.eq.s32.totalorder %s9, 0
    %p50 = por %p48, %p49
    %p51 = scmp.ne.s32.totalorder %s43, %s45
    %p52 = scmp.eq.s32.totalorder %s14, 1
    %p53 = por %p51, %p52
    %p54 = scmp.ne.s32.totalorder %s45, %s46
    %p55 = scmp.eq.s32.totalorder %s14, 0
    %p56 = por %p54, %p55
    %p57 = scmp.ne.s32.totalorder %s45, %s46
    %p58 = scmp.eq.s32.totalorder %s15, 1
    %p59 = por %p57, %p58
    %p61 = scmp.ne.s32.totalorder %s46, %s60
    %p62 = scmp.eq.s32.totalorder %s15, 0
    %p63 = por %p61, %p62
    %s65 = sadd.s32 %s64, 1
    %p68 = scmp.eq.s32.totalorder %s9, 1
    %p69 = scmp.ne.s32.totalorder %s64, %s66
    %p70 = scmp.eq.s32.totalorder %s9, 0
    %p71 = por %p69, %p70
    %p72 = scmp.ne.s32.totalorder %s64, %s66
    %p73 = scmp.eq.s32.totalorder %s14, 1
    %p74 = por %p72, %p73
    %p75 = scmp.ne.s32.totalorder %s66, %s67
    %p76 = scmp.eq.s32.totalorder %s14, 0
    %p77 = por %p75, %p76
    %p78 = scmp.ne.s32.totalorder %s66, %s67
    %p79 = scmp.eq.s32.totalorder %s15, 1
    %p80 = por %p78, %p79
    %p82 = scmp.ne.s32.totalorder %s67, %s81
    %p83 = scmp.eq.s32.totalorder %s15, 0
    %p84 = por %p82, %p83
    %s85 = ssub.s32 %s9, %s16
    %p86 = scmp.eq.s32.totalorder %s85, 0
    %s88 = sadd.s32 %s87, 1
    %s89 = scalar_select %p86, %s87, %s88
    %p92 = pneg %p86
    %p93 = scmp.eq.s32.totalorder %s9, 1
    %p94 = por %p92, %p93
    %p95 = scmp.ne.s32.totalorder %s87, %s90
    %p96 = scmp.eq.s32.totalorder %s9, 0
    %p97 = por %p95, %p96
    %p98 = scmp.ne.s32.totalorder %s87, %s90
    %p99 = scmp.eq.s32.totalorder %s14, 1
    %p100 = por %p98, %p99
    %p101 = scmp.ne.s32.totalorder %s90, %s91
    %p102 = scmp.eq.s32.totalorder %s14, 0
    %p103 = por %p101, %p102
    %p104 = scmp.ne.s32.totalorder %s90, %s91
    %p105 = scmp.eq.s32.totalorder %s15, 1
    %p106 = por %p104, %p105
    %p108 = scmp.ne.s32.totalorder %s91, %s107
    %p109 = scmp.eq.s32.totalorder %s15, 0
    %p110 = por %p108, %p109
    %p111 = scmp.le.s32.totalorder 1, %s9
    %p112 = scmp.lt.s32.totalorder %s9, 3
    %p113 = pnand %p111, %p112
    %p114 = pneg %p113
    // Predicated region
    $region9: #{net_forward.5} parent=5 // pred_check
      _
    $region10: #{net_forward.5} parent=5 // pred_check_branch
      %116 = sbr.rel (%p113) target = $region12
    $region11: #{net_forward.5} parent=5 // pred_region
      %s117 = ssub.s32 %s9, 1
      // Predicated region
      $region13: #{net_forward.5} parent=11 // pred_check
        %p118 = pneg %p56
      $region14: #{net_forward.5} parent=11 // pred_check_branch
        %120 = sbr.rel (%p118) target = $region16
      $region15: #{net_forward.5} parent=11 // pred_region
        _
      $region16: #{net_forward.5} parent=11 // pred_fallthru
        _
      // Predicated region
      $region17: #{net_forward.5} parent=11 // pred_check
        %p121 = pneg %p77
      $region18: #{net_forward.5} parent=11 // pred_check_branch
        %123 = sbr.rel (%p121) target = $region20
      $region19: #{net_forward.5} parent=11 // pred_region
        _
      $region20: #{net_forward.5} parent=11 // pred_fallthru
        _
    $region12: #{net_forward.5} parent=5 // pred_fallthru
      _
    %p124 = scmp.lt.s32.totalorder %s9, 2
    // Predicated region
    $region21: #{net_forward.5} parent=5 // pred_check
      %p125 = pneg %p124
    $region22: #{net_forward.5} parent=5 // pred_check_branch
      %127 = sbr.rel (%p125) target = $region24
    $region23: #{net_forward.5} parent=5 // pred_region
      // Predicated region
      $region25: #{net_forward.5} parent=23 // pred_check
        %p128 = pneg %p29
      $region26: #{net_forward.5} parent=23 // pred_check_branch
        %130 = sbr.rel (%p128) target = $region28
      $region27: #{net_forward.5} parent=23 // pred_region
        %p131 = scmp.lt.s32.totalorder %s9, 1
        %s132 = scalar_select %p131, %s9, 1
        %s133 = smul.addr %s132, 5
        %s134 = smul.addr %s133, 4
        %s135 = scalar_lea.vmem %s0, %s134
      $region28: #{net_forward.5} parent=23 // pred_fallthru
        _
    $region24: #{net_forward.5} parent=5 // pred_fallthru
      _
    %p136 = scmp.le.s32.totalorder 1, %s9
    %p137 = scmp.lt.s32.totalorder %s9, 3
    %p138 = pnand %p136, %p137
    %p139 = pneg %p138
    // Predicated region
    $region29: #{net_forward.5} parent=5 // pred_check
      _
    $region30: #{net_forward.5} parent=5 // pred_check_branch
      %141 = sbr.rel (%p138) target = $region32
    $region31: #{net_forward.5} parent=5 // pred_region
      %s142 = ssub.s32 %s9, 1
      %p143 = scmp.lt.s32.totalorder %s14, 1
      %s144 = scalar_select %p143, %s14, 1
      %s145 = smul.addr %s144, 5
      %s146 = smul.addr %s145, 4
      %s147 = scalar_lea.vmem %s0, %s146
      %p148 = pneg %p35
      %p149 = pneg %p32
      %p150 = pneg %p56
      %p151 = pneg %p53
      %p152 = pneg %p77
      %p153 = pneg %p74
      %p154 = pneg %p103
      %p155 = pneg %p100
      %p156 = scmp.lt.s32.totalorder %s14, 1
      %s157 = scalar_select %p156, %s14, 1
      %s158 = smul.addr %s157, 4
      %s159 = smul.addr %s158, 4
      %s160 = scalar_lea.vmem %s3, %s159
      %p161 = scmp.lt.s32.totalorder %s14, 1
      %s162 = scalar_select %p161, %s14, 1
      %s163 = smul.addr %s162, 5
      %s164 = smul.addr %s163, 4
      %s165 = scalar_lea.vmem %s0, %s164
      %p166 = scmp.lt.s32.totalorder %s14, 1
      %s167 = scalar_select %p166, %s14, 1
      %s168 = smul.addr %s167, 4
      %s169 = smul.addr %s168, 4
      %s170 = scalar_lea.vmem %s3, %s169
      %v172 = vld [vmem:[%s165] sm:$0xf]
      %v173 = vld [vmem:[%s165 + $0x4] sm:$0xf]
      %v174 = vld [vmem:[%s165 + $0x8] sm:$0xf]
      %v175 = vld [vmem:[%s165 + $0xc] sm:$0xf]
      %v176 = vld [vmem:[%s165 + $0x10] sm:$0xf]
      %v177 = vunpack.c.l.bf16 %v172
      %v178 = vunpack.c.l.bf16 %v173
      %v179 = vunpack.c.l.bf16 %v174
      %v180 = vunpack.c.l.bf16 %v175
      %v181 = vunpack.c.l.bf16 %v176
      %v182 = vpack.c.bf16 %v178, %v177
      %v183 = vpack.c.bf16 %v180, %v179
      %v184 = vpack.c.bf16 %v181, %v181
      %v185 = vld [vmem:[%s1] sm:$0xf]
      %v186 = vld [vmem:[%s1 + $0x4] sm:$0xf]
      %v187 = vld [vmem:[%s1 + $0x8] sm:$0xf]
      %v188 = vld [vmem:[%s1 + $0xc] sm:$0xf]
      %v189 = vld [vmem:[%s1 + $0x10] sm:$0xf]
      %v190 = vld [vmem:[%s1 + $0x14] sm:$0xf]
      %v191 = vld [vmem:[%s1 + $0x18] sm:$0xf]
      %v192 = vld [vmem:[%s1 + $0x1c] sm:$0xf]
      %v193 = vld [vmem:[%s1 + $0x20] sm:$0xf]
      %v194 = vld [vmem:[%s1 + $0x24] sm:$0xf]
      %v195 = vld [vmem:[%s1 + $0x28] sm:$0xf]
      %v196 = vld [vmem:[%s1 + $0x2c] sm:$0xf]
      %v197 = vld [vmem:[%s1 + $0x30] sm:$0xf]
      %v198 = vld [vmem:[%s1 + $0x34] sm:$0xf]
      %v199 = vld [vmem:[%s1 + $0x38] sm:$0xf]
      %v200 = vld [vmem:[%s1 + $0x3c] sm:$0xf]
      %s201 = scalar_lea.vmem %s1, 64
      %v202 = vld [vmem:[%s201] sm:$0xf]
      %v203 = vld [vmem:[%s201 + $0x4] sm:$0xf]
      %v204 = vld [vmem:[%s201 + $0x8] sm:$0xf]
      %v205 = vld [vmem:[%s201 + $0xc] sm:$0xf]
      %v206 = vld [vmem:[%s201 + $0x10] sm:$0xf]
      %v207 = vld [vmem:[%s201 + $0x14] sm:$0xf]
      %v208 = vld [vmem:[%s201 + $0x18] sm:$0xf]
      %v209 = vld [vmem:[%s201 + $0x1c] sm:$0xf]
      %v210 = vld [vmem:[%s201 + $0x20] sm:$0xf]
      %v211 = vld [vmem:[%s201 + $0x24] sm:$0xf]
      %v212 = vld [vmem:[%s201 + $0x28] sm:$0xf]
      %v213 = vld [vmem:[%s201 + $0x2c] sm:$0xf]
      %v214 = vld [vmem:[%s201 + $0x30] sm:$0xf]
      %v215 = vld [vmem:[%s201 + $0x34] sm:$0xf]
      %v216 = vld [vmem:[%s201 + $0x38] sm:$0xf]
      %v217 = vld [vmem:[%s201 + $0x3c] sm:$0xf]
      %vm218 = vsmask.f32 7424
      %v220 = vshrl.u32 %v182, 16
      %v222 = vshll.u32 %v182, 16
      %v224 = vrot.slane %v222, 1
      %v225 = vor.u32 %v220, %v224
      %v227 = vshll.u32 %v183, 16
      %v229 = vrot.slane %v227, 1
      %v230 = vsel %vm218, %v225, %v229
      %v231 = vshrl.u32 %v183, 16
      %v233 = vor.u32 %v231, %v229
      %v235 = vshll.u32 %v184, 16
      %v237 = vrot.slane %v235, 1
      %v238 = vsel %vm218, %v233, %v237
      %v239 = vshrl.u32 %v184, 16
      %v241 = vor.u32 %v239, %v237
      %v261 = vunpack.c.l.b16 %v202
      %v262 = vunpack.c.l.b16 %v203
      %v263 = vunpack.c.l.b16 %v204
      %v264 = vunpack.c.l.b16 %v205
      %v265 = vunpack.c.l.b16 %v206
      %v266 = vunpack.c.l.b16 %v207
      %v267 = vunpack.c.l.b16 %v208
      %v268 = vunpack.c.l.b16 %v209
      %v269 = vunpack.c.l.b16 %v210
      %v270 = vunpack.c.l.b16 %v211
      %v271 = vunpack.c.l.b16 %v212
      %v272 = vunpack.c.l.b16 %v213
      %v273 = vunpack.c.l.b16 %v214
      %v274 = vunpack.c.l.b16 %v215
      %v275 = vunpack.c.l.b16 %v216
      %v276 = vunpack.c.l.b16 %v217
      %v277 = vpack.c.b16 %v262, %v261
      %v278 = vpack.c.b16 %v264, %v263
      %v279 = vpack.c.b16 %v266, %v265
      %v280 = vpack.c.b16 %v268, %v267
      %v281 = vpack.c.b16 %v270, %v269
      %v282 = vpack.c.b16 %v272, %v271
      %v283 = vpack.c.b16 %v274, %v273
      %v284 = vpack.c.b16 %v276, %v275
      %293 = vmatprep.subr.bf16.mxu0 0
      %294 = vmatpush1.bf16.msra.mxu0 %v284
      %295 = vmatprep.subr.bf16.mxu0 0
      %296 = vmatpush1.bf16.msra.mxu0 %v283
      %297 = vmatprep.subr.bf16.mxu0 0
      %298 = vmatpush1.bf16.msra.mxu0 %v282
      %299 = vmatprep.subr.bf16.mxu0 0
      %300 = vmatpush1.bf16.msra.mxu0 %v281
      %301 = vmatprep.subr.bf16.mxu0 0
      %302 = vmatpush1.bf16.msra.mxu0 %v280
      %303 = vmatprep.subr.bf16.mxu0 0
      %304 = vmatpush1.bf16.msra.mxu0 %v279
      %305 = vmatprep.subr.bf16.mxu0 0
      %306 = vmatpush1.bf16.msra.mxu0 %v278
      %307 = vmatprep.subr.bf16.mxu0 0
      %308 = vmatpush1.bf16.msra.mxu0 %v277
      %309 = vmatprep.subr.bf16.mxu0 0
      %310 = vmatpush2.bf16.msra.mxu0 0
      %311 = vmatprep.subr.bf16.mxu0 0
      %312 = vmatpush2.bf16.msra.mxu0 0
      %313 = vmatprep.subr.bf16.mxu0 0
      %314 = vmatpush2.bf16.msra.mxu0 0
      %315 = vmatprep.subr.bf16.mxu0 0
      %316 = vmatpush2.bf16.msra.mxu0 0
      %317 = vmatprep.subr.bf16.mxu0 0
      %318 = vmatpush2.bf16.msra.mxu0 0
      %319 = vmatprep.subr.bf16.mxu0 0
      %320 = vmatpush2.bf16.msra.mxu0 0
      %321 = vmatprep.subr.bf16.mxu0 0
      %322 = vmatpush2.bf16.msra.mxu0 0
      %323 = vmatprep.subr.bf16.mxu0 0
      %324 = vmatpush2.bf16.msra.mxu0 0
      %325 = vmatprep.mubr.bf16.mxu0 0
      %326 = vmatmul.mubr.bf16.gmra.mxu0 %v230
      %v327 = vpop.f32.mrf.mxu0
      %v328 = vadd.f32 0.0, %v327
      %v329 = vpop.f32.mrf.mxu0
      %v330 = vpop.f32.mrf.mxu0
      %v331 = vadd.f32 0.0, %v330
      %v332 = vpop.f32.mrf.mxu0
      %333 = vmatprep.mubr.bf16.mxu0 0
      %334 = vmatmul.mubr.bf16.gmra.mxu0 %v238
      %v335 = vpop.f32.mrf.mxu0
      %v336 = vadd.f32 0.0, %v335
      %v337 = vpop.f32.mrf.mxu0
      %v338 = vpop.f32.mrf.mxu0
      %v339 = vadd.f32 0.0, %v338
      %v340 = vpop.f32.mrf.mxu0
      %341 = vmatprep.mubr.bf16.mxu0 0
      %342 = vmatmul.mubr.bf16.gmra.mxu0 %v241
      %v343 = vpop.f32.mrf.mxu0
      %v344 = vadd.f32 0.0, %v343
      %v345 = vpop.f32.mrf.mxu0
      %v346 = vpop.f32.mrf.mxu0
      %v347 = vpop.f32.mrf.mxu0
      %348 = vdwg.mxu0
      %v365 = vunpack.c.l.b16 %v185
      %v366 = vunpack.c.l.b16 %v186
      %v367 = vunpack.c.l.b16 %v187
      %v368 = vunpack.c.l.b16 %v188
      %v369 = vunpack.c.l.b16 %v189
      %v370 = vunpack.c.l.b16 %v190
      %v371 = vunpack.c.l.b16 %v191
      %v372 = vunpack.c.l.b16 %v192
      %v373 = vunpack.c.l.b16 %v193
      %v374 = vunpack.c.l.b16 %v194
      %v375 = vunpack.c.l.b16 %v195
      %v376 = vunpack.c.l.b16 %v196
      %v377 = vunpack.c.l.b16 %v197
      %v378 = vunpack.c.l.b16 %v198
      %v379 = vunpack.c.l.b16 %v199
      %v380 = vunpack.c.l.b16 %v200
      %v381 = vpack.c.b16 %v366, %v365
      %v382 = vpack.c.b16 %v368, %v367
      %v383 = vpack.c.b16 %v370, %v369
      %v384 = vpack.c.b16 %v372, %v371
      %v385 = vpack.c.b16 %v374, %v373
      %v386 = vpack.c.b16 %v376, %v375
      %v387 = vpack.c.b16 %v378, %v377
      %v388 = vpack.c.b16 %v380, %v379
      %397 = vmatprep.subr.bf16.mxu0 0
      %398 = vmatpush1.bf16.msra.mxu0 %v388
      %399 = vmatprep.subr.bf16.mxu0 0
      %400 = vmatpush1.bf16.msra.mxu0 %v387
      %401 = vmatprep.subr.bf16.mxu0 0
      %402 = vmatpush1.bf16.msra.mxu0 %v386
      %403 = vmatprep.subr.bf16.mxu0 0
      %404 = vmatpush1.bf16.msra.mxu0 %v385
      %405 = vmatprep.subr.bf16.mxu0 0
      %406 = vmatpush1.bf16.msra.mxu0 %v384
      %407 = vmatprep.subr.bf16.mxu0 0
      %408 = vmatpush1.bf16.msra.mxu0 %v383
      %409 = vmatprep.subr.bf16.mxu0 0
      %410 = vmatpush1.bf16.msra.mxu0 %v382
      %411 = vmatprep.subr.bf16.mxu0 0
      %412 = vmatpush1.bf16.msra.mxu0 %v381
      %413 = vmatprep.subr.bf16.mxu0 0
      %414 = vmatpush2.bf16.msra.mxu0 0
      %415 = vmatprep.subr.bf16.mxu0 0
      %416 = vmatpush2.bf16.msra.mxu0 0
      %417 = vmatprep.subr.bf16.mxu0 0
      %418 = vmatpush2.bf16.msra.mxu0 0
      %419 = vmatprep.subr.bf16.mxu0 0
      %420 = vmatpush2.bf16.msra.mxu0 0
      %421 = vmatprep.subr.bf16.mxu0 0
      %422 = vmatpush2.bf16.msra.mxu0 0
      %423 = vmatprep.subr.bf16.mxu0 0
      %424 = vmatpush2.bf16.msra.mxu0 0
      %425 = vmatprep.subr.bf16.mxu0 0
      %426 = vmatpush2.bf16.msra.mxu0 0
      %427 = vmatprep.subr.bf16.mxu0 0
      %428 = vmatpush2.bf16.msra.mxu0 0
      %429 = vmatprep.mubr.bf16.mxu0 0
      %430 = vmatmul.mubr.bf16.gmra.mxu0 %v182
      %v431 = vpop.f32.mrf.mxu0
      %v432 = vadd.f32 %v328, %v431
      %v433 = vpop.f32.mrf.mxu0
      %v434 = vpop.f32.mrf.mxu0
      %v435 = vadd.f32 %v331, %v434
      %v436 = vpop.f32.mrf.mxu0
      %437 = vmatprep.mubr.bf16.mxu0 0
      %438 = vmatmul.mubr.bf16.gmra.mxu0 %v183
      %v439 = vpop.f32.mrf.mxu0
      %v440 = vadd.f32 %v336, %v439
      %v441 = vpop.f32.mrf.mxu0
      %v442 = vpop.f32.mrf.mxu0
      %v443 = vadd.f32 %v339, %v442
      %v444 = vpop.f32.mrf.mxu0
      %445 = vmatprep.mubr.bf16.mxu0 0
      %446 = vmatmul.mubr.bf16.gmra.mxu0 %v184
      %v447 = vpop.f32.mrf.mxu0
      %v448 = vadd.f32 %v344, %v447
      %v449 = vpop.f32.mrf.mxu0
      %v450 = vpop.f32.mrf.mxu0
      %v451 = vpop.f32.mrf.mxu0
      %452 = vdwg.mxu0
      %s453 = scalar_lea.vmem %s1, 128
      %v454 = vld [vmem:[%s453] sm:$0xf]
      %v455 = vld [vmem:[%s453 + $0x4] sm:$0xf]
      %v456 = vld [vmem:[%s453 + $0x8] sm:$0xf]
      %v457 = vld [vmem:[%s453 + $0xc] sm:$0xf]
      %v458 = vld [vmem:[%s453 + $0x10] sm:$0xf]
      %v459 = vld [vmem:[%s453 + $0x14] sm:$0xf]
      %v460 = vld [vmem:[%s453 + $0x18] sm:$0xf]
      %v461 = vld [vmem:[%s453 + $0x1c] sm:$0xf]
      %v462 = vld [vmem:[%s453 + $0x20] sm:$0xf]
      %v463 = vld [vmem:[%s453 + $0x24] sm:$0xf]
      %v464 = vld [vmem:[%s453 + $0x28] sm:$0xf]
      %v465 = vld [vmem:[%s453 + $0x2c] sm:$0xf]
      %v466 = vld [vmem:[%s453 + $0x30] sm:$0xf]
      %v467 = vld [vmem:[%s453 + $0x34] sm:$0xf]
      %v468 = vld [vmem:[%s453 + $0x38] sm:$0xf]
      %v469 = vld [vmem:[%s453 + $0x3c] sm:$0xf]
      %vm473 = vcmask 1046528
      %v474 = vrot.slane %v182, 1
      %v475 = vrot.slane %v183, 1
      %v476 = vsel %vm473, %v474, %v475
      %v477 = vrot.slane %v184, 1
      %v478 = vsel %vm473, %v475, %v477
      %v498 = vunpack.c.l.b16 %v454
      %v499 = vunpack.c.l.b16 %v455
      %v500 = vunpack.c.l.b16 %v456
      %v501 = vunpack.c.l.b16 %v457
      %v502 = vunpack.c.l.b16 %v458
      %v503 = vunpack.c.l.b16 %v459
      %v504 = vunpack.c.l.b16 %v460
      %v505 = vunpack.c.l.b16 %v461
      %v506 = vunpack.c.l.b16 %v462
      %v507 = vunpack.c.l.b16 %v463
      %v508 = vunpack.c.l.b16 %v464
      %v509 = vunpack.c.l.b16 %v465
      %v510 = vunpack.c.l.b16 %v466
      %v511 = vunpack.c.l.b16 %v467
      %v512 = vunpack.c.l.b16 %v468
      %v513 = vunpack.c.l.b16 %v469
      %v514 = vpack.c.b16 %v499, %v498
      %v515 = vpack.c.b16 %v501, %v500
      %v516 = vpack.c.b16 %v503, %v502
      %v517 = vpack.c.b16 %v505, %v504
      %v518 = vpack.c.b16 %v507, %v506
      %v519 = vpack.c.b16 %v509, %v508
      %v520 = vpack.c.b16 %v511, %v510
      %v521 = vpack.c.b16 %v513, %v512
      %530 = vmatprep.subr.bf16.mxu0 0
      %531 = vmatpush1.bf16.msra.mxu0 %v521
      %532 = vmatprep.subr.bf16.mxu0 0
      %533 = vmatpush1.bf16.msra.mxu0 %v520
      %534 = vmatprep.subr.bf16.mxu0 0
      %535 = vmatpush1.bf16.msra.mxu0 %v519
      %536 = vmatprep.subr.bf16.mxu0 0
      %537 = vmatpush1.bf16.msra.mxu0 %v518
      %538 = vmatprep.subr.bf16.mxu0 0
      %539 = vmatpush1.bf16.msra.mxu0 %v517
      %540 = vmatprep.subr.bf16.mxu0 0
      %541 = vmatpush1.bf16.msra.mxu0 %v516
      %542 = vmatprep.subr.bf16.mxu0 0
      %543 = vmatpush1.bf16.msra.mxu0 %v515
      %544 = vmatprep.subr.bf16.mxu0 0
      %545 = vmatpush1.bf16.msra.mxu0 %v514
      %546 = vmatprep.subr.bf16.mxu0 0
      %547 = vmatpush2.bf16.msra.mxu0 0
      %548 = vmatprep.subr.bf16.mxu0 0
      %549 = vmatpush2.bf16.msra.mxu0 0
      %550 = vmatprep.subr.bf16.mxu0 0
      %551 = vmatpush2.bf16.msra.mxu0 0
      %552 = vmatprep.subr.bf16.mxu0 0
      %553 = vmatpush2.bf16.msra.mxu0 0
      %554 = vmatprep.subr.bf16.mxu0 0
      %555 = vmatpush2.bf16.msra.mxu0 0
      %556 = vmatprep.subr.bf16.mxu0 0
      %557 = vmatpush2.bf16.msra.mxu0 0
      %558 = vmatprep.subr.bf16.mxu0 0
      %559 = vmatpush2.bf16.msra.mxu0 0
      %560 = vmatprep.subr.bf16.mxu0 0
      %561 = vmatpush2.bf16.msra.mxu0 0
      %562 = vmatprep.mubr.bf16.mxu0 0
      %563 = vmatmul.mubr.bf16.gmra.mxu0 %v476
      %v564 = vpop.f32.mrf.mxu0
      %v565 = vadd.f32 0.0, %v564
      %v566 = vpop.f32.mrf.mxu0
      %v567 = vpop.f32.mrf.mxu0
      %v568 = vadd.f32 0.0, %v567
      %v569 = vpop.f32.mrf.mxu0
      %570 = vmatprep.mubr.bf16.mxu0 0
      %571 = vmatmul.mubr.bf16.gmra.mxu0 %v478
      %v572 = vpop.f32.mrf.mxu0
      %v573 = vadd.f32 0.0, %v572
      %v574 = vpop.f32.mrf.mxu0
      %v575 = vpop.f32.mrf.mxu0
      %v576 = vadd.f32 0.0, %v575
      %v577 = vpop.f32.mrf.mxu0
      %578 = vmatprep.mubr.bf16.mxu0 0
      %579 = vmatmul.mubr.bf16.gmra.mxu0 %v477
      %v580 = vpop.f32.mrf.mxu0
      %v581 = vadd.f32 0.0, %v580
      %v582 = vpop.f32.mrf.mxu0
      %v583 = vpop.f32.mrf.mxu0
      %v584 = vpop.f32.mrf.mxu0
      %585 = vdwg.mxu0
      %v586 = vadd.f32 %v432, %v565
      %v587 = vadd.f32 %v435, %v568
      %v588 = vadd.f32 %v440, %v573
      %v589 = vadd.f32 %v443, %v576
      %v590 = vadd.f32 %v448, %v581
      %s591 = scalar_lea.vmem %s1, 192
      %v592 = vld [vmem:[%s591] sm:$0xf]
      %v593 = vld [vmem:[%s591 + $0x4] sm:$0xf]
      %v594 = vld [vmem:[%s591 + $0x8] sm:$0xf]
      %v595 = vld [vmem:[%s591 + $0xc] sm:$0xf]
      %v596 = vld [vmem:[%s591 + $0x10] sm:$0xf]
      %v597 = vld [vmem:[%s591 + $0x14] sm:$0xf]
      %v598 = vld [vmem:[%s591 + $0x18] sm:$0xf]
      %v599 = vld [vmem:[%s591 + $0x1c] sm:$0xf]
      %v600 = vld [vmem:[%s591 + $0x20] sm:$0xf]
      %v601 = vld [vmem:[%s591 + $0x24] sm:$0xf]
      %v602 = vld [vmem:[%s591 + $0x28] sm:$0xf]
      %v603 = vld [vmem:[%s591 + $0x2c] sm:$0xf]
      %v604 = vld [vmem:[%s591 + $0x30] sm:$0xf]
      %v605 = vld [vmem:[%s591 + $0x34] sm:$0xf]
      %v606 = vld [vmem:[%s591 + $0x38] sm:$0xf]
      %v607 = vld [vmem:[%s591 + $0x3c] sm:$0xf]
      %vm608 = vsmask.f32 6400
      %v609 = vrot.slane %v220, 1
      %v610 = vrot.slane %v222, 2
      %v611 = vor.u32 %v609, %v610
      %v612 = vrot.slane %v231, 1
      %v613 = vrot.slane %v227, 2
      %v614 = vor.u32 %v612, %v613
      %v615 = vsel %vm608, %v611, %v614
      %v616 = vrot.slane %v239, 1
      %v617 = vrot.slane %v235, 2
      %v618 = vor.u32 %v616, %v617
      %v619 = vsel %vm608, %v614, %v618
      %v639 = vunpack.c.l.b16 %v592
      %v640 = vunpack.c.l.b16 %v593
      %v641 = vunpack.c.l.b16 %v594
      %v642 = vunpack.c.l.b16 %v595
      %v643 = vunpack.c.l.b16 %v596
      %v644 = vunpack.c.l.b16 %v597
      %v645 = vunpack.c.l.b16 %v598
      %v646 = vunpack.c.l.b16 %v599
      %v647 = vunpack.c.l.b16 %v600
      %v648 = vunpack.c.l.b16 %v601
      %v649 = vunpack.c.l.b16 %v602
      %v650 = vunpack.c.l.b16 %v603
      %v651 = vunpack.c.l.b16 %v604
      %v652 = vunpack.c.l.b16 %v605
      %v653 = vunpack.c.l.b16 %v606
      %v654 = vunpack.c.l.b16 %v607
      %v655 = vpack.c.b16 %v640, %v639
      %v656 = vpack.c.b16 %v642, %v641
      %v657 = vpack.c.b16 %v644, %v643
      %v658 = vpack.c.b16 %v646, %v645
      %v659 = vpack.c.b16 %v648, %v647
      %v660 = vpack.c.b16 %v650, %v649
      %v661 = vpack.c.b16 %v652, %v651
      %v662 = vpack.c.b16 %v654, %v653
      %671 = vmatprep.subr.bf16.mxu0 0
      %672 = vmatpush1.bf16.msra.mxu0 %v662
      %673 = vmatprep.subr.bf16.mxu0 0
      %674 = vmatpush1.bf16.msra.mxu0 %v661
      %675 = vmatprep.subr.bf16.mxu0 0
      %676 = vmatpush1.bf16.msra.mxu0 %v660
      %677 = vmatprep.subr.bf16.mxu0 0
      %678 = vmatpush1.bf16.msra.mxu0 %v659
      %679 = vmatprep.subr.bf16.mxu0 0
      %680 = vmatpush1.bf16.msra.mxu0 %v658
      %681 = vmatprep.subr.bf16.mxu0 0
      %682 = vmatpush1.bf16.msra.mxu0 %v657
      %683 = vmatprep.subr.bf16.mxu0 0
      %684 = vmatpush1.bf16.msra.mxu0 %v656
      %685 = vmatprep.subr.bf16.mxu0 0
      %686 = vmatpush1.bf16.msra.mxu0 %v655
      %687 = vmatprep.subr.bf16.mxu0 0
      %688 = vmatpush2.bf16.msra.mxu0 0
      %689 = vmatprep.subr.bf16.mxu0 0
      %690 = vmatpush2.bf16.msra.mxu0 0
      %691 = vmatprep.subr.bf16.mxu0 0
      %692 = vmatpush2.bf16.msra.mxu0 0
      %693 = vmatprep.subr.bf16.mxu0 0
      %694 = vmatpush2.bf16.msra.mxu0 0
      %695 = vmatprep.subr.bf16.mxu0 0
      %696 = vmatpush2.bf16.msra.mxu0 0
      %697 = vmatprep.subr.bf16.mxu0 0
      %698 = vmatpush2.bf16.msra.mxu0 0
      %699 = vmatprep.subr.bf16.mxu0 0
      %700 = vmatpush2.bf16.msra.mxu0 0
      %701 = vmatprep.subr.bf16.mxu0 0
      %702 = vmatpush2.bf16.msra.mxu0 0
      %703 = vmatprep.mubr.bf16.mxu0 0
      %704 = vmatmul.mubr.bf16.gmra.mxu0 %v615
      %v705 = vpop.f32.mrf.mxu0
      %v706 = vadd.f32 0.0, %v705
      %v707 = vpop.f32.mrf.mxu0
      %v708 = vpop.f32.mrf.mxu0
      %v709 = vadd.f32 0.0, %v708
      %v710 = vpop.f32.mrf.mxu0
      %711 = vmatprep.mubr.bf16.mxu0 0
      %712 = vmatmul.mubr.bf16.gmra.mxu0 %v619
      %v713 = vpop.f32.mrf.mxu0
      %v714 = vadd.f32 0.0, %v713
      %v715 = vpop.f32.mrf.mxu0
      %v716 = vpop.f32.mrf.mxu0
      %v717 = vadd.f32 0.0, %v716
      %v718 = vpop.f32.mrf.mxu0
      %719 = vmatprep.mubr.bf16.mxu0 0
      %720 = vmatmul.mubr.bf16.gmra.mxu0 %v618
      %v721 = vpop.f32.mrf.mxu0
      %v722 = vadd.f32 0.0, %v721
      %v723 = vpop.f32.mrf.mxu0
      %v724 = vpop.f32.mrf.mxu0
      %v725 = vpop.f32.mrf.mxu0
      %726 = vdwg.mxu0
      %v727 = vadd.f32 %v586, %v706
      %v728 = vadd.f32 %v587, %v709
      %v729 = vadd.f32 %v588, %v714
      %v730 = vadd.f32 %v589, %v717
      %v731 = vadd.f32 %v590, %v722
      %v732 = vld [vmem:[%s2] sm:$0x1]
      %v734 = vlaneseq
      %v735 = vshrl.u32 %v734, 7
      %v736 = vsub.s32 0, %v735
      %v737 = vrot.slane %v732, %v736
      %v739 = vadd.f32 %v727, %v737
      %v740 = vadd.f32 %v728, %v737
      %v741 = vadd.f32 %v729, %v737
      %v742 = vadd.f32 %v730, %v737
      %v743 = vadd.f32 %v731, %v737
      %v744 = vmax.f32 %v739, 0.0
      %v745 = vmax.f32 %v740, 0.0
      %v746 = vmax.f32 %v741, 0.0
      %v747 = vmax.f32 %v742, 0.0
      %v748 = vmax.f32 %v743, 0.0
      %vm754 = vcmask 1046528
      %v755 = vrot.slane %v744, 1
      %v756 = vrot.slane %v745, 1
      %v757 = vsel %vm754, %v755, %v756
      %v758 = vrot.slane %v746, 1
      %v759 = vsel %vm754, %v756, %v758
      %v760 = vrot.slane %v747, 1
      %v761 = vsel %vm754, %v758, %v760
      %v762 = vrot.slane %v748, 1
      %v763 = vsel %vm754, %v760, %v762
      %v768 = vmax.f32 %v744, %v757
      %v769 = vmax.f32 %v745, %v759
      %v770 = vmax.f32 %v746, %v761
      %v771 = vmax.f32 %v747, %v763
      %vm772 = vcmask 1045504
      %v773 = vrot.slane %v744, 2
      %v774 = vrot.slane %v745, 2
      %v775 = vsel %vm772, %v773, %v774
      %v776 = vrot.slane %v746, 2
      %v777 = vsel %vm772, %v774, %v776
      %v778 = vrot.slane %v747, 2
      %v779 = vsel %vm772, %v776, %v778
      %v780 = vrot.slane %v748, 2
      %v781 = vsel %vm772, %v778, %v780
      %v786 = vmax.f32 %v768, %v775
      %v787 = vmax.f32 %v769, %v777
      %v788 = vmax.f32 %v770, %v779
      %v789 = vmax.f32 %v771, %v781
      %vm790 = vcmask 1044480
      %v791 = vrot.slane %v744, 3
      %v792 = vrot.slane %v745, 3
      %v793 = vsel %vm790, %v791, %v792
      %v794 = vrot.slane %v746, 3
      %v795 = vsel %vm790, %v792, %v794
      %v796 = vrot.slane %v747, 3
      %v797 = vsel %vm790, %v794, %v796
      %v798 = vrot.slane %v748, 3
      %v799 = vsel %vm790, %v796, %v798
      %v804 = vmax.f32 %v786, %v793
      %v805 = vmax.f32 %v787, %v795
      %v806 = vmax.f32 %v788, %v797
      %v807 = vmax.f32 %v789, %v799
      %vm808 = vcmask 1043456
      %v809 = vrot.slane %v744, 4
      %v810 = vrot.slane %v745, 4
      %v811 = vsel %vm808, %v809, %v810
      %v812 = vrot.slane %v746, 4
      %v813 = vsel %vm808, %v810, %v812
      %v814 = vrot.slane %v747, 4
      %v815 = vsel %vm808, %v812, %v814
      %v816 = vrot.slane %v748, 4
      %v817 = vsel %vm808, %v814, %v816
      %v822 = vmax.f32 %v804, %v811
      %v823 = vmax.f32 %v805, %v813
      %v824 = vmax.f32 %v806, %v815
      %v825 = vmax.f32 %v807, %v817
      %v826 = vpack.c.bf16 %v823, %v822
      %v827 = vpack.c.bf16 %v825, %v824
      %v830 = vunpack.c.l.b16 %v826
      %v831 = vunpack.c.h.b16 %v826
      %v832 = vunpack.c.l.b16 %v827
      %v833 = vunpack.c.h.b16 %v827
      %v834 = vpack.c.b16 %v830, %v830
      %v835 = vpack.c.b16 %v831, %v831
      %v836 = vpack.c.b16 %v832, %v832
      %v837 = vpack.c.b16 %v833, %v833
      %842 = vst [vmem:[%s170] sm:$0xf] %v834
      %843 = vst [vmem:[%s170 + $0x4] sm:$0xf] %v835
      %844 = vst [vmem:[%s170 + $0x8] sm:$0xf] %v836
      %845 = vst [vmem:[%s170 + $0xc] sm:$0xf] %v837
      %p846 = scmp.lt.s32.totalorder %s14, 1
      %s847 = scalar_select %p846, %s14, 1
      %s848 = smul.addr %s847, 4
      %s849 = smul.addr %s848, 4
      %s850 = scalar_lea.vmem %s3, %s849
      // Predicated region
      $region33: #{net_forward.5} parent=31 // pred_check
        %p851 = pneg %p100
      $region34: #{net_forward.5} parent=31 // pred_check_branch
        %853 = sbr.rel (%p851) target = $region36
      $region35: #{net_forward.5} parent=31 // pred_region
        _
      $region36: #{net_forward.5} parent=31 // pred_fallthru
        _
    $region32: #{net_forward.5} parent=5 // pred_fallthru
      _
    %p854 = scmp.le.s32.totalorder 2, %s9
    // Predicated region
    $region37: #{net_forward.5} parent=5 // pred_check
      %p855 = pneg %p854
    $region38: #{net_forward.5} parent=5 // pred_check_branch
      %857 = sbr.rel (%p855) target = $region40
    $region39: #{net_forward.5} parent=5 // pred_region
      %s858 = ssub.s32 %s9, 2
      // Predicated region
      $region41: #{net_forward.5} parent=39 // pred_check
        %p859 = pneg %p106
      $region42: #{net_forward.5} parent=39 // pred_check_branch
        %861 = sbr.rel (%p859) target = $region44
      $region43: #{net_forward.5} parent=39 // pred_region
        %p862 = scmp.lt.s32.totalorder %s15, 1
        %s863 = scalar_select %p862, %s15, 1
        %s864 = smul.addr %s863, 4
        %s865 = smul.addr %s864, 4
        %s866 = scalar_lea.vmem %s3, %s865
      $region44: #{net_forward.5} parent=39 // pred_fallthru
        _
    $region40: #{net_forward.5} parent=5 // pred_fallthru
      _
  $region6: #{net_forward.5} parent=0 // loop_footer
    %s13 = sadd.s32 1, %s9
  $region7: #{net_forward.5} parent=0 // loop_footer_branch
    %8 = sbr.rel target = $region3
  $region8: #{net_forward.5} parent=0 // loop_exit
    _

// kernel: net_forward.7
$region0: #{net_forward.7}
  #allocation0 [shape = 'u32[]', space=smem, size = 0x4, offset = 0x4, fixed_abs, tag = 'smem constant byte address 0x4 - core index']
  #allocation1 [shape = 'u32[144,128]{1,0:T(1,128)}', space=vmem, size = 0x12000, scoped, tag = 'internal scratch']
  %s0 = inlined_call_operand.vmem [shape: bf16[8,128], index: 0, kind: input, shape index: {}]
  %s1 = inlined_call_operand.vmem [shape: bf16[128,128], index: 1, kind: input, shape index: {}]
  %s2 = inlined_call_operand.vmem [shape: f32[1,128], index: 2, kind: input, shape index: {}]
  %s3 = inlined_call_operand.vmem [shape: bf16[128,128], index: 3, kind: input, shape index: {}]
  %s4 = inlined_call_operand.vmem [shape: f32[1,128], index: 4, kind: input, shape index: {}]
  %s5 = inlined_call_operand.vmem [shape: bf16[128,128], index: 5, kind: input, shape index: {}]
  %s6 = inlined_call_operand.vmem [shape: f32[1,128], index: 6, kind: input, shape index: {}]
  %s7 = inlined_call_operand.vmem [shape: f32[8,128], index: 7, kind: output, shape index: {}]
  %s8 = sld [smem:[#allocation0]]
  $region38: #{net_forward.7} parent=0
    _
  %s10 = ssub.s32 1, %s8
  %s11 = scalar_select 0, %s10, %s8
  // Predicated region
  $region2: #{net_forward.7} parent=0 // pred_check
    _
  $region3: #{net_forward.7} parent=0 // pred_check_branch
    %13 = sbr.rel (0) target = $region5
  $region4: #{net_forward.7} parent=0 // pred_region
    _
  $region5: #{net_forward.7} parent=0 // pred_fallthru
    _
  // Predicated region
  $region6: #{net_forward.7} parent=0 // pred_check
    _
  $region7: #{net_forward.7} parent=0 // pred_check_branch
    %15 = sbr.rel (0) target = $region9
  $region8: #{net_forward.7} parent=0 // pred_region
    _
  $region9: #{net_forward.7} parent=0 // pred_fallthru
    _
  // Predicated region
  $region10: #{net_forward.7} parent=0 // pred_check
    _
  $region11: #{net_forward.7} parent=0 // pred_check_branch
    %17 = sbr.rel (0) target = $region13
  $region12: #{net_forward.7} parent=0 // pred_region
    _
  $region13: #{net_forward.7} parent=0 // pred_fallthru
    _
  // Predicated region
  $region14: #{net_forward.7} parent=0 // pred_check
    _
  $region15: #{net_forward.7} parent=0 // pred_check_branch
    %19 = sbr.rel (0) target = $region17
  $region16: #{net_forward.7} parent=0 // pred_region
    _
  $region17: #{net_forward.7} parent=0 // pred_fallthru
    _
  // Predicated region
  $region18: #{net_forward.7} parent=0 // pred_check
    _
  $region19: #{net_forward.7} parent=0 // pred_check_branch
    %21 = sbr.rel (0) target = $region21
  $region20: #{net_forward.7} parent=0 // pred_region
    _
  $region21: #{net_forward.7} parent=0 // pred_fallthru
    _
  // Predicated region
  $region22: #{net_forward.7} parent=0 // pred_check
    _
  $region23: #{net_forward.7} parent=0 // pred_check_branch
    %23 = sbr.rel (0) target = $region25
  $region24: #{net_forward.7} parent=0 // pred_region
    _
  $region25: #{net_forward.7} parent=0 // pred_fallthru
    _
  // Predicated region
  $region26: #{net_forward.7} parent=0 // pred_check
    _
  $region27: #{net_forward.7} parent=0 // pred_check_branch
    %25 = sbr.rel (0) target = $region29
  $region28: #{net_forward.7} parent=0 // pred_region
    _
  $region29: #{net_forward.7} parent=0 // pred_fallthru
    _
  %v27 = vld [vmem:[%s0] sm:$0xf]
  %v28 = vld [vmem:[%s1] sm:$0xf]
  %v29 = vld [vmem:[%s1 + $0x4] sm:$0xf]
  %v30 = vld [vmem:[%s1 + $0x8] sm:$0xf]
  %v31 = vld [vmem:[%s1 + $0xc] sm:$0xf]
  %v32 = vld [vmem:[%s1 + $0x10] sm:$0xf]
  %v33 = vld [vmem:[%s1 + $0x14] sm:$0xf]
  %v34 = vld [vmem:[%s1 + $0x18] sm:$0xf]
  %v35 = vld [vmem:[%s1 + $0x1c] sm:$0xf]
  %v36 = vld [vmem:[%s1 + $0x20] sm:$0xf]
  %v37 = vld [vmem:[%s1 + $0x24] sm:$0xf]
  %v38 = vld [vmem:[%s1 + $0x28] sm:$0xf]
  %v39 = vld [vmem:[%s1 + $0x2c] sm:$0xf]
  %v40 = vld [vmem:[%s1 + $0x30] sm:$0xf]
  %v41 = vld [vmem:[%s1 + $0x34] sm:$0xf]
  %v42 = vld [vmem:[%s1 + $0x38] sm:$0xf]
  %v43 = vld [vmem:[%s1 + $0x3c] sm:$0xf]
  %v44 = vld [vmem:[%s2] sm:$0x1]
  %v46 = vlaneseq
  %v47 = vshrl.u32 %v46, 7
  %v48 = vsub.s32 0, %v47
  %v49 = vrot.slane %v44, %v48
  %v67 = vunpack.c.l.b16 %v28
  %v68 = vunpack.c.l.b16 %v29
  %v69 = vunpack.c.l.b16 %v30
  %v70 = vunpack.c.l.b16 %v31
  %v71 = vunpack.c.l.b16 %v32
  %v72 = vunpack.c.l.b16 %v33
  %v73 = vunpack.c.l.b16 %v34
  %v74 = vunpack.c.l.b16 %v35
  %v75 = vunpack.c.l.b16 %v36
  %v76 = vunpack.c.l.b16 %v37
  %v77 = vunpack.c.l.b16 %v38
  %v78 = vunpack.c.l.b16 %v39
  %v79 = vunpack.c.l.b16 %v40
  %v80 = vunpack.c.l.b16 %v41
  %v81 = vunpack.c.l.b16 %v42
  %v82 = vunpack.c.l.b16 %v43
  %v83 = vpack.c.b16 %v68, %v67
  %v84 = vpack.c.b16 %v70, %v69
  %v85 = vpack.c.b16 %v72, %v71
  %v86 = vpack.c.b16 %v74, %v73
  %v87 = vpack.c.b16 %v76, %v75
  %v88 = vpack.c.b16 %v78, %v77
  %v89 = vpack.c.b16 %v80, %v79
  %v90 = vpack.c.b16 %v82, %v81
  %99 = vmatprep.subr.bf16.mxu0 0
  %100 = vmatpush1.bf16.msra.mxu0 %v90
  %101 = vmatprep.subr.bf16.mxu0 0
  %102 = vmatpush1.bf16.msra.mxu0 %v89
  %103 = vmatprep.subr.bf16.mxu0 0
  %104 = vmatpush1.bf16.msra.mxu0 %v88
  %105 = vmatprep.subr.bf16.mxu0 0
  %106 = vmatpush1.bf16.msra.mxu0 %v87
  %107 = vmatprep.subr.bf16.mxu0 0
  %108 = vmatpush1.bf16.msra.mxu0 %v86
  %109 = vmatprep.subr.bf16.mxu0 0
  %110 = vmatpush1.bf16.msra.mxu0 %v85
  %111 = vmatprep.subr.bf16.mxu0 0
  %112 = vmatpush1.bf16.msra.mxu0 %v84
  %113 = vmatprep.subr.bf16.mxu0 0
  %114 = vmatpush1.bf16.msra.mxu0 %v83
  %115 = vmatprep.subr.bf16.mxu0 0
  %116 = vmatpush2.bf16.msra.mxu0 0
  %117 = vmatprep.subr.bf16.mxu0 0
  %118 = vmatpush2.bf16.msra.mxu0 0
  %119 = vmatprep.subr.bf16.mxu0 0
  %120 = vmatpush2.bf16.msra.mxu0 0
  %121 = vmatprep.subr.bf16.mxu0 0
  %122 = vmatpush2.bf16.msra.mxu0 0
  %123 = vmatprep.subr.bf16.mxu0 0
  %124 = vmatpush2.bf16.msra.mxu0 0
  %125 = vmatprep.subr.bf16.mxu0 0
  %126 = vmatpush2.bf16.msra.mxu0 0
  %127 = vmatprep.subr.bf16.mxu0 0
  %128 = vmatpush2.bf16.msra.mxu0 0
  %129 = vmatprep.subr.bf16.mxu0 0
  %130 = vmatpush2.bf16.msra.mxu0 0
  %131 = vmatprep.mubr.bf16.mxu0 0
  %132 = vmatmul.mubr.bf16.gmra.mxu0 %v27
  %v133 = vpop.f32.mrf.mxu0
  %v134 = vadd.f32 %v49, %v133
  %v135 = vpop.f32.mrf.mxu0
  %v136 = vpop.f32.mrf.mxu0
  %v137 = vpop.f32.mrf.mxu0
  %138 = vdwg.mxu0
  %v139 = vmax.f32 %v134, 0.0
  %v140 = vpack.c.bf16 %v139, %v139
  %v141 = vld [vmem:[%s3] sm:$0xf]
  %v142 = vld [vmem:[%s3 + $0x4] sm:$0xf]
  %v143 = vld [vmem:[%s3 + $0x8] sm:$0xf]
  %v144 = vld [vmem:[%s3 + $0xc] sm:$0xf]
  %v145 = vld [vmem:[%s3 + $0x10] sm:$0xf]
  %v146 = vld [vmem:[%s3 + $0x14] sm:$0xf]
  %v147 = vld [vmem:[%s3 + $0x18] sm:$0xf]
  %v148 = vld [vmem:[%s3 + $0x1c] sm:$0xf]
  %v149 = vld [vmem:[%s3 + $0x20] sm:$0xf]
  %v150 = vld [vmem:[%s3 + $0x24] sm:$0xf]
  %v151 = vld [vmem:[%s3 + $0x28] sm:$0xf]
  %v152 = vld [vmem:[%s3 + $0x2c] sm:$0xf]
  %v153 = vld [vmem:[%s3 + $0x30] sm:$0xf]
  %v154 = vld [vmem:[%s3 + $0x34] sm:$0xf]
  %v155 = vld [vmem:[%s3 + $0x38] sm:$0xf]
  %v156 = vld [vmem:[%s3 + $0x3c] sm:$0xf]
  %v157 = vld [vmem:[%s4] sm:$0x1]
  %v159 = vlaneseq
  %v160 = vshrl.u32 %v159, 7
  %v161 = vsub.s32 0, %v160
  %v162 = vrot.slane %v157, %v161
  %v180 = vunpack.c.l.b16 %v141
  %v181 = vunpack.c.l.b16 %v142
  %v182 = vunpack.c.l.b16 %v143
  %v183 = vunpack.c.l.b16 %v144
  %v184 = vunpack.c.l.b16 %v145
  %v185 = vunpack.c.l.b16 %v146
  %v186 = vunpack.c.l.b16 %v147
  %v187 = vunpack.c.l.b16 %v148
  %v188 = vunpack.c.l.b16 %v149
  %v189 = vunpack.c.l.b16 %v150
  %v190 = vunpack.c.l.b16 %v151
  %v191 = vunpack.c.l.b16 %v152
  %v192 = vunpack.c.l.b16 %v153
  %v193 = vunpack.c.l.b16 %v154
  %v194 = vunpack.c.l.b16 %v155
  %v195 = vunpack.c.l.b16 %v156
  %v196 = vpack.c.b16 %v181, %v180
  %v197 = vpack.c.b16 %v183, %v182
  %v198 = vpack.c.b16 %v185, %v184
  %v199 = vpack.c.b16 %v187, %v186
  %v200 = vpack.c.b16 %v189, %v188
  %v201 = vpack.c.b16 %v191, %v190
  %v202 = vpack.c.b16 %v193, %v192
  %v203 = vpack.c.b16 %v195, %v194
  %212 = vmatprep.subr.bf16.mxu0 0
  %213 = vmatpush1.bf16.msra.mxu0 %v203
  %214 = vmatprep.subr.bf16.mxu0 0
  %215 = vmatpush1.bf16.msra.mxu0 %v202
  %216 = vmatprep.subr.bf16.mxu0 0
  %217 = vmatpush1.bf16.msra.mxu0 %v201
  %218 = vmatprep.subr.bf16.mxu0 0
  %219 = vmatpush1.bf16.msra.mxu0 %v200
  %220 = vmatprep.subr.bf16.mxu0 0
  %221 = vmatpush1.bf16.msra.mxu0 %v199
  %222 = vmatprep.subr.bf16.mxu0 0
  %223 = vmatpush1.bf16.msra.mxu0 %v198
  %224 = vmatprep.subr.bf16.mxu0 0
  %225 = vmatpush1.bf16.msra.mxu0 %v197
  %226 = vmatprep.subr.bf16.mxu0 0
  %227 = vmatpush1.bf16.msra.mxu0 %v196
  %228 = vmatprep.subr.bf16.mxu0 0
  %229 = vmatpush2.bf16.msra.mxu0 0
  %230 = vmatprep.subr.bf16.mxu0 0
  %231 = vmatpush2.bf16.msra.mxu0 0
  %232 = vmatprep.subr.bf16.mxu0 0
  %233 = vmatpush2.bf16.msra.mxu0 0
  %234 = vmatprep.subr.bf16.mxu0 0
  %235 = vmatpush2.bf16.msra.mxu0 0
  %236 = vmatprep.subr.bf16.mxu0 0
  %237 = vmatpush2.bf16.msra.mxu0 0
  %238 = vmatprep.subr.bf16.mxu0 0
  %239 = vmatpush2.bf16.msra.mxu0 0
  %240 = vmatprep.subr.bf16.mxu0 0
  %241 = vmatpush2.bf16.msra.mxu0 0
  %242 = vmatprep.subr.bf16.mxu0 0
  %243 = vmatpush2.bf16.msra.mxu0 0
  %244 = vmatprep.mubr.bf16.mxu0 0
  %245 = vmatmul.mubr.bf16.gmra.mxu0 %v140
  %v246 = vpop.f32.mrf.mxu0
  %v247 = vadd.f32 %v162, %v246
  %v248 = vpop.f32.mrf.mxu0
  %v249 = vpop.f32.mrf.mxu0
  %v250 = vpop.f32.mrf.mxu0
  %251 = vdwg.mxu0
  %v252 = vmax.f32 %v247, 0.0
  %v253 = vpack.c.bf16 %v252, %v252
  %v254 = vld [vmem:[%s5] sm:$0xf]
  %v255 = vld [vmem:[%s5 + $0x4] sm:$0xf]
  %v256 = vld [vmem:[%s5 + $0x8] sm:$0xf]
  %v257 = vld [vmem:[%s5 + $0xc] sm:$0xf]
  %v258 = vld [vmem:[%s5 + $0x10] sm:$0xf]
  %v259 = vld [vmem:[%s5 + $0x14] sm:$0xf]
  %v260 = vld [vmem:[%s5 + $0x18] sm:$0xf]
  %v261 = vld [vmem:[%s5 + $0x1c] sm:$0xf]
  %v262 = vld [vmem:[%s5 + $0x20] sm:$0xf]
  %v263 = vld [vmem:[%s5 + $0x24] sm:$0xf]
  %v264 = vld [vmem:[%s5 + $0x28] sm:$0xf]
  %v265 = vld [vmem:[%s5 + $0x2c] sm:$0xf]
  %v266 = vld [vmem:[%s5 + $0x30] sm:$0xf]
  %v267 = vld [vmem:[%s5 + $0x34] sm:$0xf]
  %v268 = vld [vmem:[%s5 + $0x38] sm:$0xf]
  %v269 = vld [vmem:[%s5 + $0x3c] sm:$0xf]
  %v270 = vld [vmem:[%s6] sm:$0x1]
  %v272 = vlaneseq
  %v273 = vshrl.u32 %v272, 7
  %v274 = vsub.s32 0, %v273
  %v275 = vrot.slane %v270, %v274
  %v293 = vunpack.c.l.b16 %v254
  %v294 = vunpack.c.l.b16 %v255
  %v295 = vunpack.c.l.b16 %v256
  %v296 = vunpack.c.l.b16 %v257
  %v297 = vunpack.c.l.b16 %v258
  %v298 = vunpack.c.l.b16 %v259
  %v299 = vunpack.c.l.b16 %v260
  %v300 = vunpack.c.l.b16 %v261
  %v301 = vunpack.c.l.b16 %v262
  %v302 = vunpack.c.l.b16 %v263
  %v303 = vunpack.c.l.b16 %v264
  %v304 = vunpack.c.l.b16 %v265
  %v305 = vunpack.c.l.b16 %v266
  %v306 = vunpack.c.l.b16 %v267
  %v307 = vunpack.c.l.b16 %v268
  %v308 = vunpack.c.l.b16 %v269
  %v309 = vpack.c.b16 %v294, %v293
  %v310 = vpack.c.b16 %v296, %v295
  %v311 = vpack.c.b16 %v298, %v297
  %v312 = vpack.c.b16 %v300, %v299
  %v313 = vpack.c.b16 %v302, %v301
  %v314 = vpack.c.b16 %v304, %v303
  %v315 = vpack.c.b16 %v306, %v305
  %v316 = vpack.c.b16 %v308, %v307
  %325 = vmatprep.subr.bf16.mxu0 0
  %326 = vmatpush1.bf16.msra.mxu0 %v316
  %327 = vmatprep.subr.bf16.mxu0 0
  %328 = vmatpush1.bf16.msra.mxu0 %v315
  %329 = vmatprep.subr.bf16.mxu0 0
  %330 = vmatpush1.bf16.msra.mxu0 %v314
  %331 = vmatprep.subr.bf16.mxu0 0
  %332 = vmatpush1.bf16.msra.mxu0 %v313
  %333 = vmatprep.subr.bf16.mxu0 0
  %334 = vmatpush1.bf16.msra.mxu0 %v312
  %335 = vmatprep.subr.bf16.mxu0 0
  %336 = vmatpush1.bf16.msra.mxu0 %v311
  %337 = vmatprep.subr.bf16.mxu0 0
  %338 = vmatpush1.bf16.msra.mxu0 %v310
  %339 = vmatprep.subr.bf16.mxu0 0
  %340 = vmatpush1.bf16.msra.mxu0 %v309
  %341 = vmatprep.subr.bf16.mxu0 0
  %342 = vmatpush2.bf16.msra.mxu0 0
  %343 = vmatprep.subr.bf16.mxu0 0
  %344 = vmatpush2.bf16.msra.mxu0 0
  %345 = vmatprep.subr.bf16.mxu0 0
  %346 = vmatpush2.bf16.msra.mxu0 0
  %347 = vmatprep.subr.bf16.mxu0 0
  %348 = vmatpush2.bf16.msra.mxu0 0
  %349 = vmatprep.subr.bf16.mxu0 0
  %350 = vmatpush2.bf16.msra.mxu0 0
  %351 = vmatprep.subr.bf16.mxu0 0
  %352 = vmatpush2.bf16.msra.mxu0 0
  %353 = vmatprep.subr.bf16.mxu0 0
  %354 = vmatpush2.bf16.msra.mxu0 0
  %355 = vmatprep.subr.bf16.mxu0 0
  %356 = vmatpush2.bf16.msra.mxu0 0
  %357 = vmatprep.mubr.bf16.mxu0 0
  %358 = vmatmul.mubr.bf16.gmra.mxu0 %v253
  %v359 = vpop.f32.mrf.mxu0
  %v360 = vadd.f32 %v275, %v359
  %v361 = vpop.f32.mrf.mxu0
  %v362 = vpop.f32.mrf.mxu0
  %v363 = vpop.f32.mrf.mxu0
  %364 = vdwg.mxu0
  %365 = vst [vmem:[%s7] sm:$0xff] %v360
  // Predicated region
  $region30: #{net_forward.7} parent=0 // pred_check
    _
  $region31: #{net_forward.7} parent=0 // pred_check_branch
    %367 = sbr.rel (0) target = $region33
  $region32: #{net_forward.7} parent=0 // pred_region
    _
  $region33: #{net_forward.7} parent=0 // pred_fallthru
    _
  // Predicated region
  $region34: #{net_forward.7} parent=0 // pred_check
    _
  $region35: #{net_forward.7} parent=0 // pred_check_branch
    %369 = sbr.rel (0) target = $region37
  $region36: #{net_forward.7} parent=0 // pred_region
    _
  $region37: #{net_forward.7} parent=0 // pred_fallthru
    _

</llo_original>
